<compile_context>
chip_gen: v7x
topology: tpu7x:2x2x1
jax: 0.10.0
libtpu: 0.0.40
codegen_flags: <defaults>
</compile_context>

<pallas_src>
import functools

import jax
import jax.numpy as jnp
from jax import lax
from jax.experimental import pallas as pl
from jax.experimental.pallas import tpu as pltpu


def _conv_bn_relu_kernel(x_ref, w_ref, scale_ref, bias_ref, o_ref, acc_ref,
                         *, kh, kw, wp, tm):
    # x_ref    : (R_img, Cin)         f32  -- whole padded, row-flattened image (this n)
    # w_ref    : (kh*kw, Cin, Coutp)  bf16 -- conv weight per tap
    # scale_ref: (1, Coutp)           f32  -- gamma / sqrt(var + eps)   (BN folded)
    # bias_ref : (1, Coutp)           f32  -- beta - mean * scale
    # o_ref    : (tm, Coutp)          f32  -- output row tile
    # acc_ref  : (tm, Coutp)          f32  -- VMEM accumulator scratch
    m0 = pl.program_id(1) * tm          # element offset of this output row tile
    first = True
    for i in range(kh):
        for j in range(kw):
            off = i * wp + j             # static flat-row offset of this tap
            base = (off // 8) * 8        # 8-aligned part (static)
            rem = off - base             # remaining sub-shift (static, < 8)
            start = pl.multiple_of(m0 + base, 8)
            blk = x_ref[pl.ds(start, tm + 8), :]          # aligned dynamic slice
            lhs = blk[rem:rem + tm, :].astype(jnp.bfloat16)  # static sub-shift + bf16
            part = jnp.dot(lhs, w_ref[i * kw + j],
                           preferred_element_type=jnp.float32)
            if first:
                acc_ref[...] = part
                first = False
            else:
                acc_ref[...] += part
    y = acc_ref[...] * scale_ref[...] + bias_ref[...]
    o_ref[...] = jnp.maximum(y, 0.0).astype(o_ref.dtype)


def basic_conv2d(x_nchw, weight, gamma, beta, running_mean, running_var,
                 *, stride=1, padding=1, eps=1e-5):
    """Fused Conv2d(bias=False, stride=1) + BatchNorm2d(eval) + ReLU."""
    assert stride == 1, "this kernel is specialized to stride=1"
    N, Cin, H, W = x_nchw.shape
    Cout, Cin_w, kh, kw = weight.shape
    assert Cin == Cin_w

    Ho = H + 2 * padding - kh + 1
    Wo = W + 2 * padding - kw + 1
    Wp = W + 2 * padding

    coutp = ((Cout + 127) // 128) * 128          # lane-dense output channels

    # --- row tiling of the flattened output (Ho x Wp rows, garbage cols kept) ---
    rows_img = Ho * Wp
    ntiles = pl.cdiv(rows_img, 256)
    tm = ((pl.cdiv(rows_img, ntiles) + 7) // 8) * 8
    grid_m = pl.cdiv(rows_img, tm)
    m_out = grid_m * tm

    # padded-image rows needed so every in-kernel read stays in bounds
    rows_needed = m_out + (kh - 1) * Wp + (kw - 1) + 8
    hp_tot = pl.cdiv(rows_needed, Wp)
    r_img = hp_tot * Wp
    bot_pad = hp_tot - H - padding
    assert bot_pad >= 0

    # --- glue (single pass over the original-sized tensor, no 9x blow-up) ---
    x = jnp.transpose(x_nchw, (0, 2, 3, 1))                         # NHWC
    xp = jnp.pad(x, ((0, 0), (padding, bot_pad), (padding, padding), (0, 0)))
    x_flat = xp.reshape(N, r_img, Cin)                              # f32 rows

    # weight (Cout,Cin,kh,kw) -> (kh*kw, Cin, Coutp) bf16, tap order i*kw + j
    w = jnp.transpose(weight, (2, 3, 1, 0)).reshape(kh * kw, Cin, Cout)
    w = jnp.pad(w, ((0, 0), (0, 0), (0, coutp - Cout))).astype(jnp.bfloat16)

    # fold BN (inference) into per-channel scale + bias, padded channels -> 0
    inv_std = gamma / jnp.sqrt(running_var + eps)
    scale = jnp.pad(inv_std, (0, coutp - Cout)).reshape(1, coutp).astype(jnp.float32)
    bias = jnp.pad(beta - running_mean * inv_std,
                   (0, coutp - Cout)).reshape(1, coutp).astype(jnp.float32)

    kernel = functools.partial(_conv_bn_relu_kernel, kh=kh, kw=kw, wp=Wp, tm=tm)

    flops = 2 * N * Ho * Wo * (kh * kw * Cin) * Cout
    bytes_accessed = (x_flat.size * 4 + w.size * 2
                      + N * m_out * coutp * 4 + 2 * coutp * 4)

    out = pl.pallas_call(
        kernel,
        out_shape=jax.ShapeDtypeStruct((N, m_out, coutp), jnp.float32),
        grid_spec=pltpu.PrefetchScalarGridSpec(
            num_scalar_prefetch=0,
            grid=(N, grid_m),
            in_specs=[
                # whole padded image stays VMEM-resident while m varies
                pl.BlockSpec((None, r_img, Cin), lambda n, m: (n, 0, 0)),
                pl.BlockSpec((kh * kw, Cin, coutp), lambda n, m: (0, 0, 0)),
                pl.BlockSpec((1, coutp), lambda n, m: (0, 0)),
                pl.BlockSpec((1, coutp), lambda n, m: (0, 0)),
            ],
            out_specs=pl.BlockSpec((None, tm, coutp), lambda n, m: (n, m, 0)),
            scratch_shapes=[pltpu.VMEM((tm, coutp), jnp.float32)],
        ),
        compiler_params=pltpu.CompilerParams(
            dimension_semantics=("parallel", "parallel"),
            vmem_limit_bytes=48 * 1024 * 1024),
        cost_estimate=pl.CostEstimate(
            flops=flops, transcendentals=0, bytes_accessed=bytes_accessed),
    )(x_flat, w, scale, bias)

    # drop padded rows / wrap-around columns / padded channels, back to NCHW
    out = out[:, :rows_img, :Cout].reshape(N, Ho, Wp, Cout)[:, :, :Wo, :]
    return jnp.transpose(out, (0, 3, 1, 2))


def _reference(x_nchw, weight, gamma, beta, running_mean, running_var,
               *, stride=1, padding=1, eps=1e-5):
    y = lax.conv_general_dilated(
        x_nchw, weight,
        window_strides=(stride, stride),
        padding=((padding, padding), (padding, padding)),
        dimension_numbers=("NCHW", "OIHW", "NCHW"),
        precision=lax.Precision.HIGHEST)
    scale = gamma / jnp.sqrt(running_var + eps)
    shift = beta - running_mean * scale
    y = y * scale[None, :, None, None] + shift[None, :, None, None]
    return jnp.maximum(y, 0.0)


if __name__ == "__main__":
    key = jax.random.PRNGKey(0)
    k_x, k_w, k_g, k_b, k_m, k_v = jax.random.split(key, 6)

    N, Cin, H, W = 2, 4, 16, 16
    Cout, kh, kw = 8, 3, 3

    x = jax.random.normal(k_x, (N, Cin, H, W), dtype=jnp.float32)
    weight = jax.random.normal(k_w, (Cout, Cin, kh, kw), dtype=jnp.float32) * 0.1
    gamma = jax.random.uniform(k_g, (Cout,), minval=0.5, maxval=1.5, dtype=jnp.float32)
    beta = jax.random.normal(k_b, (Cout,), dtype=jnp.float32) * 0.1
    running_mean = jax.random.normal(k_m, (Cout,), dtype=jnp.float32) * 0.1
    running_var = jax.random.uniform(k_v, (Cout,), minval=0.5, maxval=1.5, dtype=jnp.float32)

    fn = jax.jit(functools.partial(basic_conv2d, stride=1, padding=1, eps=1e-5))
    out = jax.block_until_ready(fn(x, weight, gamma, beta, running_mean, running_var))

    ref = _reference(x, weight, gamma, beta, running_mean, running_var,
                     stride=1, padding=1, eps=1e-5)
    assert out.shape == (N, Cout, H, W)
    max_err = float(jnp.max(jnp.abs(out - ref)))
    # tolerance accounts for bf16 MXU operands (f32 accumulation)
    assert jnp.allclose(out, ref, rtol=3e-2, atol=3e-2), f"mismatch vs reference: {max_err}"

    print("KERNEL_OK")
</pallas_src>

<mosaic_0001>
module attributes {stable_mosaic.version = 11 : i64} {
  func.func @_conv_bn_relu_kernel(%arg0: i32, %arg1: i32, %arg2: memref<1x342x4xf32, #tpu.memory_space<vmem>>, %arg3: memref<9x4x128xbf16, #tpu.memory_space<vmem>>, %arg4: memref<1x128xf32, #tpu.memory_space<vmem>>, %arg5: memref<1x128xf32, #tpu.memory_space<vmem>>, %arg6: memref<1x144x128xf32, #tpu.memory_space<vmem>>, %arg7: memref<144x128xf32, #tpu.memory_space<vmem>>) attributes {dimension_semantics = [#tpu.dimension_semantics<parallel>, #tpu.dimension_semantics<parallel>], iteration_bounds = array<i64: 2, 2>, scalar_prefetch = 0 : i64, scratch_operands = 1 : i64, tpu.core_type = #tpu.core_type<tc>, window_params = [{transform_indices = @transform_0, window_bounds = array<i64: 1, 342, 4>}, {pipeline_mode = #tpu.pipeline_mode<synchronous>, transform_indices = @transform_1, window_bounds = array<i64: 9, 4, 128>}, {pipeline_mode = #tpu.pipeline_mode<synchronous>, transform_indices = @transform_2, window_bounds = array<i64: 1, 128>}, {pipeline_mode = #tpu.pipeline_mode<synchronous>, transform_indices = @transform_3, window_bounds = array<i64: 1, 128>}, {transform_indices = @transform_4, window_bounds = array<i64: 1, 144, 128>}]} {
    %c144_i32 = arith.constant 144 : i32
    %0 = arith.muli %arg1, %c144_i32 : i32
    %c0_i32 = arith.constant 0 : i32
    %1 = arith.addi %0, %c0_i32 : i32
    %2 = tpu.assume_multiple %1, 8 : i32
    %c0 = arith.constant 0 : index
    %3 = arith.index_cast %2 : i32 to index
    %c0_0 = arith.constant 0 : index
    %4 = vector.load %arg2[%c0, %3, %c0_0] : memref<1x342x4xf32, #tpu.memory_space<vmem>>, vector<1x152x4xf32>
    %5 = vector.shape_cast %4 : vector<1x152x4xf32> to vector<152x4xf32>
    %6 = vector.extract_strided_slice %5 {offsets = [0, 0], sizes = [144, 4], strides = [1, 1]} : vector<152x4xf32> to vector<144x4xf32>
    %7 = arith.truncf %6 : vector<144x4xf32> to vector<144x4xbf16>
    %c0_1 = arith.constant 0 : index
    %c0_2 = arith.constant 0 : index
    %c0_3 = arith.constant 0 : index
    %8 = vector.load %arg3[%c0_1, %c0_2, %c0_3] : memref<9x4x128xbf16, #tpu.memory_space<vmem>>, vector<1x4x128xbf16>
    %9 = vector.shape_cast %8 : vector<1x4x128xbf16> to vector<4x128xbf16>
    %cst = arith.constant dense<0.000000e+00> : vector<144x128xf32>
    %10 = tpu.matmul %7, %9, %cst {dimension_numbers = #tpu.dot_dimension_numbers<[1], [0], [0], [1], [0, 0, 1, 1], [], []>} : vector<144x4xbf16>, vector<4x128xbf16>, vector<144x128xf32> -> vector<144x128xf32>
    %c0_4 = arith.constant 0 : index
    %c0_5 = arith.constant 0 : index
    %11 = vector.load %arg7[%c0_4, %c0_5] : memref<144x128xf32, #tpu.memory_space<vmem>>, vector<144x128xf32>
    tpu.vector_store %arg7[%c0_4, %c0_5], %10 {strides = array<i32>} : memref<144x128xf32, #tpu.memory_space<vmem>>, vector<144x128xf32>,
    %c0_i32_6 = arith.constant 0 : i32
    %12 = arith.addi %0, %c0_i32_6 : i32
    %13 = tpu.assume_multiple %12, 8 : i32
    %c0_7 = arith.constant 0 : index
    %14 = arith.index_cast %13 : i32 to index
    %c0_8 = arith.constant 0 : index
    %15 = vector.load %arg2[%c0_7, %14, %c0_8] : memref<1x342x4xf32, #tpu.memory_space<vmem>>, vector<1x152x4xf32>
    %16 = vector.shape_cast %15 : vector<1x152x4xf32> to vector<152x4xf32>
    %17 = vector.extract_strided_slice %16 {offsets = [1, 0], sizes = [144, 4], strides = [1, 1]} : vector<152x4xf32> to vector<144x4xf32>
    %18 = arith.truncf %17 : vector<144x4xf32> to vector<144x4xbf16>
    %c1 = arith.constant 1 : index
    %c0_9 = arith.constant 0 : index
    %c0_10 = arith.constant 0 : index
    %19 = vector.load %arg3[%c1, %c0_9, %c0_10] : memref<9x4x128xbf16, #tpu.memory_space<vmem>>, vector<1x4x128xbf16>
    %20 = vector.shape_cast %19 : vector<1x4x128xbf16> to vector<4x128xbf16>
    %cst_11 = arith.constant dense<0.000000e+00> : vector<144x128xf32>
    %21 = tpu.matmul %18, %20, %cst_11 {dimension_numbers = #tpu.dot_dimension_numbers<[1], [0], [0], [1], [0, 0, 1, 1], [], []>} : vector<144x4xbf16>, vector<4x128xbf16>, vector<144x128xf32> -> vector<144x128xf32>
    %c0_12 = arith.constant 0 : index
    %c0_13 = arith.constant 0 : index
    %22 = vector.load %arg7[%c0_12, %c0_13] : memref<144x128xf32, #tpu.memory_space<vmem>>, vector<144x128xf32>
    %23 = arith.addf %22, %21 : vector<144x128xf32>
    %c0_14 = arith.constant 0 : index
    %c0_15 = arith.constant 0 : index
    %24 = vector.load %arg7[%c0_14, %c0_15] : memref<144x128xf32, #tpu.memory_space<vmem>>, vector<144x128xf32>
    tpu.vector_store %arg7[%c0_14, %c0_15], %23 {strides = array<i32>} : memref<144x128xf32, #tpu.memory_space<vmem>>, vector<144x128xf32>,
    %c0_i32_16 = arith.constant 0 : i32
    %25 = arith.addi %0, %c0_i32_16 : i32
    %26 = tpu.assume_multiple %25, 8 : i32
    %c0_17 = arith.constant 0 : index
    %27 = arith.index_cast %26 : i32 to index
    %c0_18 = arith.constant 0 : index
    %28 = vector.load %arg2[%c0_17, %27, %c0_18] : memref<1x342x4xf32, #tpu.memory_space<vmem>>, vector<1x152x4xf32>
    %29 = vector.shape_cast %28 : vector<1x152x4xf32> to vector<152x4xf32>
    %30 = vector.extract_strided_slice %29 {offsets = [2, 0], sizes = [144, 4], strides = [1, 1]} : vector<152x4xf32> to vector<144x4xf32>
    %31 = arith.truncf %30 : vector<144x4xf32> to vector<144x4xbf16>
    %c2 = arith.constant 2 : index
    %c0_19 = arith.constant 0 : index
    %c0_20 = arith.constant 0 : index
    %32 = vector.load %arg3[%c2, %c0_19, %c0_20] : memref<9x4x128xbf16, #tpu.memory_space<vmem>>, vector<1x4x128xbf16>
    %33 = vector.shape_cast %32 : vector<1x4x128xbf16> to vector<4x128xbf16>
    %cst_21 = arith.constant dense<0.000000e+00> : vector<144x128xf32>
    %34 = tpu.matmul %31, %33, %cst_21 {dimension_numbers = #tpu.dot_dimension_numbers<[1], [0], [0], [1], [0, 0, 1, 1], [], []>} : vector<144x4xbf16>, vector<4x128xbf16>, vector<144x128xf32> -> vector<144x128xf32>
    %c0_22 = arith.constant 0 : index
    %c0_23 = arith.constant 0 : index
    %35 = vector.load %arg7[%c0_22, %c0_23] : memref<144x128xf32, #tpu.memory_space<vmem>>, vector<144x128xf32>
    %36 = arith.addf %35, %34 : vector<144x128xf32>
    %c0_24 = arith.constant 0 : index
    %c0_25 = arith.constant 0 : index
    %37 = vector.load %arg7[%c0_24, %c0_25] : memref<144x128xf32, #tpu.memory_space<vmem>>, vector<144x128xf32>
    tpu.vector_store %arg7[%c0_24, %c0_25], %36 {strides = array<i32>} : memref<144x128xf32, #tpu.memory_space<vmem>>, vector<144x128xf32>,
    %c16_i32 = arith.constant 16 : i32
    %38 = arith.addi %0, %c16_i32 : i32
    %39 = tpu.assume_multiple %38, 8 : i32
    %c0_26 = arith.constant 0 : index
    %40 = arith.index_cast %39 : i32 to index
    %c0_27 = arith.constant 0 : index
    %41 = vector.load %arg2[%c0_26, %40, %c0_27] : memref<1x342x4xf32, #tpu.memory_space<vmem>>, vector<1x152x4xf32>
    %42 = vector.shape_cast %41 : vector<1x152x4xf32> to vector<152x4xf32>
    %43 = vector.extract_strided_slice %42 {offsets = [2, 0], sizes = [144, 4], strides = [1, 1]} : vector<152x4xf32> to vector<144x4xf32>
    %44 = arith.truncf %43 : vector<144x4xf32> to vector<144x4xbf16>
    %c3 = arith.constant 3 : index
    %c0_28 = arith.constant 0 : index
    %c0_29 = arith.constant 0 : index
    %45 = vector.load %arg3[%c3, %c0_28, %c0_29] : memref<9x4x128xbf16, #tpu.memory_space<vmem>>, vector<1x4x128xbf16>
    %46 = vector.shape_cast %45 : vector<1x4x128xbf16> to vector<4x128xbf16>
    %cst_30 = arith.constant dense<0.000000e+00> : vector<144x128xf32>
    %47 = tpu.matmul %44, %46, %cst_30 {dimension_numbers = #tpu.dot_dimension_numbers<[1], [0], [0], [1], [0, 0, 1, 1], [], []>} : vector<144x4xbf16>, vector<4x128xbf16>, vector<144x128xf32> -> vector<144x128xf32>
    %c0_31 = arith.constant 0 : index
    %c0_32 = arith.constant 0 : index
    %48 = vector.load %arg7[%c0_31, %c0_32] : memref<144x128xf32, #tpu.memory_space<vmem>>, vector<144x128xf32>
    %49 = arith.addf %48, %47 : vector<144x128xf32>
    %c0_33 = arith.constant 0 : index
    %c0_34 = arith.constant 0 : index
    %50 = vector.load %arg7[%c0_33, %c0_34] : memref<144x128xf32, #tpu.memory_space<vmem>>, vector<144x128xf32>
    tpu.vector_store %arg7[%c0_33, %c0_34], %49 {strides = array<i32>} : memref<144x128xf32, #tpu.memory_space<vmem>>, vector<144x128xf32>,
    %c16_i32_35 = arith.constant 16 : i32
    %51 = arith.addi %0, %c16_i32_35 : i32
    %52 = tpu.assume_multiple %51, 8 : i32
    %c0_36 = arith.constant 0 : index
    %53 = arith.index_cast %52 : i32 to index
    %c0_37 = arith.constant 0 : index
    %54 = vector.load %arg2[%c0_36, %53, %c0_37] : memref<1x342x4xf32, #tpu.memory_space<vmem>>, vector<1x152x4xf32>
    %55 = vector.shape_cast %54 : vector<1x152x4xf32> to vector<152x4xf32>
    %56 = vector.extract_strided_slice %55 {offsets = [3, 0], sizes = [144, 4], strides = [1, 1]} : vector<152x4xf32> to vector<144x4xf32>
    %57 = arith.truncf %56 : vector<144x4xf32> to vector<144x4xbf16>
    %c4 = arith.constant 4 : index
    %c0_38 = arith.constant 0 : index
    %c0_39 = arith.constant 0 : index
    %58 = vector.load %arg3[%c4, %c0_38, %c0_39] : memref<9x4x128xbf16, #tpu.memory_space<vmem>>, vector<1x4x128xbf16>
    %59 = vector.shape_cast %58 : vector<1x4x128xbf16> to vector<4x128xbf16>
    %cst_40 = arith.constant dense<0.000000e+00> : vector<144x128xf32>
    %60 = tpu.matmul %57, %59, %cst_40 {dimension_numbers = #tpu.dot_dimension_numbers<[1], [0], [0], [1], [0, 0, 1, 1], [], []>} : vector<144x4xbf16>, vector<4x128xbf16>, vector<144x128xf32> -> vector<144x128xf32>
    %c0_41 = arith.constant 0 : index
    %c0_42 = arith.constant 0 : index
    %61 = vector.load %arg7[%c0_41, %c0_42] : memref<144x128xf32, #tpu.memory_space<vmem>>, vector<144x128xf32>
    %62 = arith.addf %61, %60 : vector<144x128xf32>
    %c0_43 = arith.constant 0 : index
    %c0_44 = arith.constant 0 : index
    %63 = vector.load %arg7[%c0_43, %c0_44] : memref<144x128xf32, #tpu.memory_space<vmem>>, vector<144x128xf32>
    tpu.vector_store %arg7[%c0_43, %c0_44], %62 {strides = array<i32>} : memref<144x128xf32, #tpu.memory_space<vmem>>, vector<144x128xf32>,
    %c16_i32_45 = arith.constant 16 : i32
    %64 = arith.addi %0, %c16_i32_45 : i32
    %65 = tpu.assume_multiple %64, 8 : i32
    %c0_46 = arith.constant 0 : index
    %66 = arith.index_cast %65 : i32 to index
    %c0_47 = arith.constant 0 : index
    %67 = vector.load %arg2[%c0_46, %66, %c0_47] : memref<1x342x4xf32, #tpu.memory_space<vmem>>, vector<1x152x4xf32>
    %68 = vector.shape_cast %67 : vector<1x152x4xf32> to vector<152x4xf32>
    %69 = vector.extract_strided_slice %68 {offsets = [4, 0], sizes = [144, 4], strides = [1, 1]} : vector<152x4xf32> to vector<144x4xf32>
    %70 = arith.truncf %69 : vector<144x4xf32> to vector<144x4xbf16>
    %c5 = arith.constant 5 : index
    %c0_48 = arith.constant 0 : index
    %c0_49 = arith.constant 0 : index
    %71 = vector.load %arg3[%c5, %c0_48, %c0_49] : memref<9x4x128xbf16, #tpu.memory_space<vmem>>, vector<1x4x128xbf16>
    %72 = vector.shape_cast %71 : vector<1x4x128xbf16> to vector<4x128xbf16>
    %cst_50 = arith.constant dense<0.000000e+00> : vector<144x128xf32>
    %73 = tpu.matmul %70, %72, %cst_50 {dimension_numbers = #tpu.dot_dimension_numbers<[1], [0], [0], [1], [0, 0, 1, 1], [], []>} : vector<144x4xbf16>, vector<4x128xbf16>, vector<144x128xf32> -> vector<144x128xf32>
    %c0_51 = arith.constant 0 : index
    %c0_52 = arith.constant 0 : index
    %74 = vector.load %arg7[%c0_51, %c0_52] : memref<144x128xf32, #tpu.memory_space<vmem>>, vector<144x128xf32>
    %75 = arith.addf %74, %73 : vector<144x128xf32>
    %c0_53 = arith.constant 0 : index
    %c0_54 = arith.constant 0 : index
    %76 = vector.load %arg7[%c0_53, %c0_54] : memref<144x128xf32, #tpu.memory_space<vmem>>, vector<144x128xf32>
    tpu.vector_store %arg7[%c0_53, %c0_54], %75 {strides = array<i32>} : memref<144x128xf32, #tpu.memory_space<vmem>>, vector<144x128xf32>,
    %c32_i32 = arith.constant 32 : i32
    %77 = arith.addi %0, %c32_i32 : i32
    %78 = tpu.assume_multiple %77, 8 : i32
    %c0_55 = arith.constant 0 : index
    %79 = arith.index_cast %78 : i32 to index
    %c0_56 = arith.constant 0 : index
    %80 = vector.load %arg2[%c0_55, %79, %c0_56] : memref<1x342x4xf32, #tpu.memory_space<vmem>>, vector<1x152x4xf32>
    %81 = vector.shape_cast %80 : vector<1x152x4xf32> to vector<152x4xf32>
    %82 = vector.extract_strided_slice %81 {offsets = [4, 0], sizes = [144, 4], strides = [1, 1]} : vector<152x4xf32> to vector<144x4xf32>
    %83 = arith.truncf %82 : vector<144x4xf32> to vector<144x4xbf16>
    %c6 = arith.constant 6 : index
    %c0_57 = arith.constant 0 : index
    %c0_58 = arith.constant 0 : index
    %84 = vector.load %arg3[%c6, %c0_57, %c0_58] : memref<9x4x128xbf16, #tpu.memory_space<vmem>>, vector<1x4x128xbf16>
    %85 = vector.shape_cast %84 : vector<1x4x128xbf16> to vector<4x128xbf16>
    %cst_59 = arith.constant dense<0.000000e+00> : vector<144x128xf32>
    %86 = tpu.matmul %83, %85, %cst_59 {dimension_numbers = #tpu.dot_dimension_numbers<[1], [0], [0], [1], [0, 0, 1, 1], [], []>} : vector<144x4xbf16>, vector<4x128xbf16>, vector<144x128xf32> -> vector<144x128xf32>
    %c0_60 = arith.constant 0 : index
    %c0_61 = arith.constant 0 : index
    %87 = vector.load %arg7[%c0_60, %c0_61] : memref<144x128xf32, #tpu.memory_space<vmem>>, vector<144x128xf32>
    %88 = arith.addf %87, %86 : vector<144x128xf32>
    %c0_62 = arith.constant 0 : index
    %c0_63 = arith.constant 0 : index
    %89 = vector.load %arg7[%c0_62, %c0_63] : memref<144x128xf32, #tpu.memory_space<vmem>>, vector<144x128xf32>
    tpu.vector_store %arg7[%c0_62, %c0_63], %88 {strides = array<i32>} : memref<144x128xf32, #tpu.memory_space<vmem>>, vector<144x128xf32>,
    %c32_i32_64 = arith.constant 32 : i32
    %90 = arith.addi %0, %c32_i32_64 : i32
    %91 = tpu.assume_multiple %90, 8 : i32
    %c0_65 = arith.constant 0 : index
    %92 = arith.index_cast %91 : i32 to index
    %c0_66 = arith.constant 0 : index
    %93 = vector.load %arg2[%c0_65, %92, %c0_66] : memref<1x342x4xf32, #tpu.memory_space<vmem>>, vector<1x152x4xf32>
    %94 = vector.shape_cast %93 : vector<1x152x4xf32> to vector<152x4xf32>
    %95 = vector.extract_strided_slice %94 {offsets = [5, 0], sizes = [144, 4], strides = [1, 1]} : vector<152x4xf32> to vector<144x4xf32>
    %96 = arith.truncf %95 : vector<144x4xf32> to vector<144x4xbf16>
    %c7 = arith.constant 7 : index
    %c0_67 = arith.constant 0 : index
    %c0_68 = arith.constant 0 : index
    %97 = vector.load %arg3[%c7, %c0_67, %c0_68] : memref<9x4x128xbf16, #tpu.memory_space<vmem>>, vector<1x4x128xbf16>
    %98 = vector.shape_cast %97 : vector<1x4x128xbf16> to vector<4x128xbf16>
    %cst_69 = arith.constant dense<0.000000e+00> : vector<144x128xf32>
    %99 = tpu.matmul %96, %98, %cst_69 {dimension_numbers = #tpu.dot_dimension_numbers<[1], [0], [0], [1], [0, 0, 1, 1], [], []>} : vector<144x4xbf16>, vector<4x128xbf16>, vector<144x128xf32> -> vector<144x128xf32>
    %c0_70 = arith.constant 0 : index
    %c0_71 = arith.constant 0 : index
    %100 = vector.load %arg7[%c0_70, %c0_71] : memref<144x128xf32, #tpu.memory_space<vmem>>, vector<144x128xf32>
    %101 = arith.addf %100, %99 : vector<144x128xf32>
    %c0_72 = arith.constant 0 : index
    %c0_73 = arith.constant 0 : index
    %102 = vector.load %arg7[%c0_72, %c0_73] : memref<144x128xf32, #tpu.memory_space<vmem>>, vector<144x128xf32>
    tpu.vector_store %arg7[%c0_72, %c0_73], %101 {strides = array<i32>} : memref<144x128xf32, #tpu.memory_space<vmem>>, vector<144x128xf32>,
    %c32_i32_74 = arith.constant 32 : i32
    %103 = arith.addi %0, %c32_i32_74 : i32
    %104 = tpu.assume_multiple %103, 8 : i32
    %c0_75 = arith.constant 0 : index
    %105 = arith.index_cast %104 : i32 to index
    %c0_76 = arith.constant 0 : index
    %106 = vector.load %arg2[%c0_75, %105, %c0_76] : memref<1x342x4xf32, #tpu.memory_space<vmem>>, vector<1x152x4xf32>
    %107 = vector.shape_cast %106 : vector<1x152x4xf32> to vector<152x4xf32>
    %108 = vector.extract_strided_slice %107 {offsets = [6, 0], sizes = [144, 4], strides = [1, 1]} : vector<152x4xf32> to vector<144x4xf32>
    %109 = arith.truncf %108 : vector<144x4xf32> to vector<144x4xbf16>
    %c8 = arith.constant 8 : index
    %c0_77 = arith.constant 0 : index
    %c0_78 = arith.constant 0 : index
    %110 = vector.load %arg3[%c8, %c0_77, %c0_78] : memref<9x4x128xbf16, #tpu.memory_space<vmem>>, vector<1x4x128xbf16>
    %111 = vector.shape_cast %110 : vector<1x4x128xbf16> to vector<4x128xbf16>
    %cst_79 = arith.constant dense<0.000000e+00> : vector<144x128xf32>
    %112 = tpu.matmul %109, %111, %cst_79 {dimension_numbers = #tpu.dot_dimension_numbers<[1], [0], [0], [1], [0, 0, 1, 1], [], []>} : vector<144x4xbf16>, vector<4x128xbf16>, vector<144x128xf32> -> vector<144x128xf32>
    %c0_80 = arith.constant 0 : index
    %c0_81 = arith.constant 0 : index
    %113 = vector.load %arg7[%c0_80, %c0_81] : memref<144x128xf32, #tpu.memory_space<vmem>>, vector<144x128xf32>
    %114 = arith.addf %113, %112 : vector<144x128xf32>
    %c0_82 = arith.constant 0 : index
    %c0_83 = arith.constant 0 : index
    %115 = vector.load %arg7[%c0_82, %c0_83] : memref<144x128xf32, #tpu.memory_space<vmem>>, vector<144x128xf32>
    tpu.vector_store %arg7[%c0_82, %c0_83], %114 {strides = array<i32>} : memref<144x128xf32, #tpu.memory_space<vmem>>, vector<144x128xf32>,
    %c0_84 = arith.constant 0 : index
    %c0_85 = arith.constant 0 : index
    %116 = vector.load %arg7[%c0_84, %c0_85] : memref<144x128xf32, #tpu.memory_space<vmem>>, vector<144x128xf32>
    %c0_86 = arith.constant 0 : index
    %c0_87 = arith.constant 0 : index
    %117 = vector.load %arg4[%c0_86, %c0_87] : memref<1x128xf32, #tpu.memory_space<vmem>>, vector<1x128xf32>
    %118 = vector.broadcast %117 : vector<1x128xf32> to vector<144x128xf32>
    %119 = arith.mulf %116, %118 : vector<144x128xf32>
    %c0_88 = arith.constant 0 : index
    %c0_89 = arith.constant 0 : index
    %120 = vector.load %arg5[%c0_88, %c0_89] : memref<1x128xf32, #tpu.memory_space<vmem>>, vector<1x128xf32>
    %121 = vector.broadcast %120 : vector<1x128xf32> to vector<144x128xf32>
    %122 = arith.addf %119, %121 : vector<144x128xf32>
    %cst_90 = arith.constant 0.000000e+00 : f32
    %123 = vector.broadcast %cst_90 : f32 to vector<144x128xf32>
    %124 = arith.maximumf %122, %123 : vector<144x128xf32>
    %c0_91 = arith.constant 0 : index
    %c0_92 = arith.constant 0 : index
    %c0_93 = arith.constant 0 : index
    %125 = vector.load %arg6[%c0_91, %c0_92, %c0_93] : memref<1x144x128xf32, #tpu.memory_space<vmem>>, vector<1x144x128xf32>
    %126 = vector.shape_cast %125 : vector<1x144x128xf32> to vector<144x128xf32>
    %127 = vector.shape_cast %124 : vector<144x128xf32> to vector<1x144x128xf32>
    tpu.vector_store %arg6[%c0_91, %c0_92, %c0_93], %127 {strides = array<i32>} : memref<1x144x128xf32, #tpu.memory_space<vmem>>, vector<1x144x128xf32>,
    return
  }
  func.func @transform_0(%arg0: i32, %arg1: i32) -> (i32, i32, i32) {
    %c0_i32 = arith.constant 0 : i32
    %c0_i32_0 = arith.constant 0 : i32
    %c0_i32_1 = arith.constant 0 : i32
    return %arg0, %c0_i32, %c0_i32_0 : i32, i32, i32
  }
  func.func @transform_1(%arg0: i32, %arg1: i32) -> (i32, i32, i32) {
    %c0_i32 = arith.constant 0 : i32
    %c0_i32_0 = arith.constant 0 : i32
    %c0_i32_1 = arith.constant 0 : i32
    %c0_i32_2 = arith.constant 0 : i32
    return %c0_i32, %c0_i32_0, %c0_i32_1 : i32, i32, i32
  }
  func.func @transform_2(%arg0: i32, %arg1: i32) -> (i32, i32) {
    %c0_i32 = arith.constant 0 : i32
    %c0_i32_0 = arith.constant 0 : i32
    %c0_i32_1 = arith.constant 0 : i32
    return %c0_i32, %c0_i32_0 : i32, i32
  }
  func.func @transform_3(%arg0: i32, %arg1: i32) -> (i32, i32) {
    %c0_i32 = arith.constant 0 : i32
    %c0_i32_0 = arith.constant 0 : i32
    %c0_i32_1 = arith.constant 0 : i32
    return %c0_i32, %c0_i32_0 : i32, i32
  }
  func.func @transform_4(%arg0: i32, %arg1: i32) -> (i32, i32, i32) {
    %c0_i32 = arith.constant 0 : i32
    %c0_i32_0 = arith.constant 0 : i32
    return %arg0, %arg1, %c0_i32 : i32, i32, i32
  }
}

</mosaic_0001>

<llo_original>
// kernel: basic_conv2d.1
$region0: #{basic_conv2d.1}
  #allocation0 [shape = 'u32[]', space=smem, size = 0x4, offset = 0x4, fixed_abs, tag = 'smem constant byte address 0x4 - core index']
  #allocation1 [shape = 'u32[144,128]{1,0:T(1,128)}', space=vmem, size = 0x12000, scoped, tag = 'internal scratch']
  #allocation2 [shape = 'f32[144,128]{1,0:T(8,128)}', space=vmem, size = 0x12000, scoped, tag = 'scratch operand']
  %s0 = inlined_call_operand.vmem [shape: f32[2,342,4], index: 0, kind: input, shape index: {}]
  %s1 = inlined_call_operand.vmem [shape: bf16[9,4,128], index: 1, kind: input, shape index: {}]
  %s2 = inlined_call_operand.vmem [shape: f32[1,128], index: 2, kind: input, shape index: {}]
  %s3 = inlined_call_operand.vmem [shape: f32[1,128], index: 3, kind: input, shape index: {}]
  %s4 = inlined_call_operand.vmem [shape: f32[2,288,128], index: 4, kind: output, shape index: {}]
  %s5 = sld [smem:[#allocation0]]
  $region49: #{basic_conv2d.1} parent=0
    _
  %s7 = ssub.s32 1, %s5
  %s8 = scalar_select 0, %s7, %s5
  loop: start=0, step=1, limit=6
  $region2: #{basic_conv2d.1} parent=0 // loop_pre_header
    _
  $region3: #{basic_conv2d.1} parent=0 // loop_header
    %s10 = sphi 0, %s14
    %p11 = scmp.ge.s32.totalorder %s10, 6
    %s17 = sphi 0, %s29
    %s18 = sphi 0, %s25
    %s19 = sphi 0, %s17
    %s20 = sphi 0, %s18
    %s21 = sphi 0, %s19
    %s22 = sphi 0, %s20
    %s32 = sphi 0, %s34
    %s35 = sphi 0, %s32
    %s36 = sphi 0, %s35
    %s52 = sphi 0, %s36
    %s56 = sphi 0, %s56
    %s58 = sphi 0, %s56
    %s59 = sphi 0, %s58
    %s73 = sphi 0, %s59
    %s77 = sphi 0, %s77
    %s79 = sphi 0, %s77
    %s80 = sphi 0, %s79
    %s94 = sphi 0, %s80
    %s98 = sphi 0, %s98
    %s100 = sphi 0, %s98
    %s101 = sphi 0, %s100
    %s115 = sphi 0, %s101
    %s123 = sphi 0, %s125
    %s126 = sphi 0, %s123
    %s127 = sphi 0, %s126
    %s143 = sphi 0, %s127
  $region4: #{basic_conv2d.1} parent=0 // loop_header_branch
    %13 = sbr.rel (%p11) target = $region8
  $region5: #{basic_conv2d.1} parent=0 // loop_body
    %s15 = ssub.s32 %s10, 1
    %s16 = ssub.s32 %s10, 2
    %s23 = sadd.s32 1, %s18
    %p24 = scmp.ge.s32.totalorder %s23, 2
    %s25 = scalar_select %p24, 0, %s23
    %s26 = sadd.s32 1, %s17
    %s27 = scalar_select %p24, %s26, %s17
    %p28 = scmp.ge.s32.totalorder %s27, 2
    %s29 = scalar_select %p28, 0, %s27
    %s30 = ssub.s32 %s17, %s29
    %p31 = scmp.eq.s32.totalorder %s30, 0
    %s33 = sadd.s32 %s32, 1
    %s34 = scalar_select %p31, %s32, %s33
    %p37 = pneg %p31
    %p38 = scmp.eq.s32.totalorder %s10, 3
    %p39 = por %p37, %p38
    %p40 = scmp.ne.s32.totalorder %s32, %s35
    %p41 = scmp.eq.s32.totalorder %s10, 0
    %p42 = por %p40, %p41
    %p43 = scmp.ne.s32.totalorder %s32, %s35
    %p44 = scmp.eq.s32.totalorder %s15, 3
    %p45 = por %p43, %p44
    %p46 = scmp.ne.s32.totalorder %s35, %s36
    %p47 = scmp.eq.s32.totalorder %s15, 0
    %p48 = por %p46, %p47
    %p49 = scmp.ne.s32.totalorder %s35, %s36
    %p50 = scmp.eq.s32.totalorder %s16, 3
    %p51 = por %p49, %p50
    %p53 = scmp.ne.s32.totalorder %s36, %s52
    %p54 = scmp.eq.s32.totalorder %s16, 0
    %p55 = por %p53, %p54
    %s57 = sadd.s32 %s56, 1
    %p60 = scmp.eq.s32.totalorder %s10, 3
    %p61 = scmp.ne.s32.totalorder %s56, %s58
    %p62 = scmp.eq.s32.totalorder %s10, 0
    %p63 = por %p61, %p62
    %p64 = scmp.ne.s32.totalorder %s56, %s58
    %p65 = scmp.eq.s32.totalorder %s15, 3
    %p66 = por %p64, %p65
    %p67 = scmp.ne.s32.totalorder %s58, %s59
    %p68 = scmp.eq.s32.totalorder %s15, 0
    %p69 = por %p67, %p68
    %p70 = scmp.ne.s32.totalorder %s58, %s59
    %p71 = scmp.eq.s32.totalorder %s16, 3
    %p72 = por %p70, %p71
    %p74 = scmp.ne.s32.totalorder %s59, %s73
    %p75 = scmp.eq.s32.totalorder %s16, 0
    %p76 = por %p74, %p75
    %s78 = sadd.s32 %s77, 1
    %p81 = scmp.eq.s32.totalorder %s10, 3
    %p82 = scmp.ne.s32.totalorder %s77, %s79
    %p83 = scmp.eq.s32.totalorder %s10, 0
    %p84 = por %p82, %p83
    %p85 = scmp.ne.s32.totalorder %s77, %s79
    %p86 = scmp.eq.s32.totalorder %s15, 3
    %p87 = por %p85, %p86
    %p88 = scmp.ne.s32.totalorder %s79, %s80
    %p89 = scmp.eq.s32.totalorder %s15, 0
    %p90 = por %p88, %p89
    %p91 = scmp.ne.s32.totalorder %s79, %s80
    %p92 = scmp.eq.s32.totalorder %s16, 3
    %p93 = por %p91, %p92
    %p95 = scmp.ne.s32.totalorder %s80, %s94
    %p96 = scmp.eq.s32.totalorder %s16, 0
    %p97 = por %p95, %p96
    %s99 = sadd.s32 %s98, 1
    %p102 = scmp.eq.s32.totalorder %s10, 3
    %p103 = scmp.ne.s32.totalorder %s98, %s100
    %p104 = scmp.eq.s32.totalorder %s10, 0
    %p105 = por %p103, %p104
    %p106 = scmp.ne.s32.totalorder %s98, %s100
    %p107 = scmp.eq.s32.totalorder %s15, 3
    %p108 = por %p106, %p107
    %p109 = scmp.ne.s32.totalorder %s100, %s101
    %p110 = scmp.eq.s32.totalorder %s15, 0
    %p111 = por %p109, %p110
    %p112 = scmp.ne.s32.totalorder %s100, %s101
    %p113 = scmp.eq.s32.totalorder %s16, 3
    %p114 = por %p112, %p113
    %p116 = scmp.ne.s32.totalorder %s101, %s115
    %p117 = scmp.eq.s32.totalorder %s16, 0
    %p118 = por %p116, %p117
    %s119 = ssub.s32 %s17, %s29
    %s120 = ssub.s32 %s18, %s25
    %s121 = sor.u32 %s119, %s120
    %p122 = scmp.eq.s32.totalorder %s121, 0
    %s124 = sadd.s32 %s123, 1
    %s125 = scalar_select %p122, %s123, %s124
    %p128 = pneg %p122
    %p129 = scmp.eq.s32.totalorder %s10, 3
    %p130 = por %p128, %p129
    %p131 = scmp.ne.s32.totalorder %s123, %s126
    %p132 = scmp.eq.s32.totalorder %s10, 0
    %p133 = por %p131, %p132
    %p134 = scmp.ne.s32.totalorder %s123, %s126
    %p135 = scmp.eq.s32.totalorder %s15, 3
    %p136 = por %p134, %p135
    %p137 = scmp.ne.s32.totalorder %s126, %s127
    %p138 = scmp.eq.s32.totalorder %s15, 0
    %p139 = por %p137, %p138
    %p140 = scmp.ne.s32.totalorder %s126, %s127
    %p141 = scmp.eq.s32.totalorder %s16, 3
    %p142 = por %p140, %p141
    %p144 = scmp.ne.s32.totalorder %s127, %s143
    %p145 = scmp.eq.s32.totalorder %s16, 0
    %p146 = por %p144, %p145
    %p147 = scmp.le.s32.totalorder 1, %s10
    %p148 = scmp.lt.s32.totalorder %s10, 5
    %p149 = pnand %p147, %p148
    %p150 = pneg %p149
    // Predicated region
    $region9: #{basic_conv2d.1} parent=5 // pred_check
      _
    $region10: #{basic_conv2d.1} parent=5 // pred_check_branch
      %152 = sbr.rel (%p149) target = $region12
    $region11: #{basic_conv2d.1} parent=5 // pred_region
      %s153 = ssub.s32 %s10, 1
      // Predicated region
      $region13: #{basic_conv2d.1} parent=11 // pred_check
        %p154 = pneg %p69
      $region14: #{basic_conv2d.1} parent=11 // pred_check_branch
        %156 = sbr.rel (%p154) target = $region16
      $region15: #{basic_conv2d.1} parent=11 // pred_region
        _
      $region16: #{basic_conv2d.1} parent=11 // pred_fallthru
        _
      // Predicated region
      $region17: #{basic_conv2d.1} parent=11 // pred_check
        %p157 = pneg %p90
      $region18: #{basic_conv2d.1} parent=11 // pred_check_branch
        %159 = sbr.rel (%p157) target = $region20
      $region19: #{basic_conv2d.1} parent=11 // pred_region
        _
      $region20: #{basic_conv2d.1} parent=11 // pred_fallthru
        _
      // Predicated region
      $region21: #{basic_conv2d.1} parent=11 // pred_check
        %p160 = pneg %p111
      $region22: #{basic_conv2d.1} parent=11 // pred_check_branch
        %162 = sbr.rel (%p160) target = $region24
      $region23: #{basic_conv2d.1} parent=11 // pred_region
        _
      $region24: #{basic_conv2d.1} parent=11 // pred_fallthru
        _
    $region12: #{basic_conv2d.1} parent=5 // pred_fallthru
      _
    %p163 = scmp.lt.s32.totalorder %s10, 4
    // Predicated region
    $region25: #{basic_conv2d.1} parent=5 // pred_check
      %p164 = pneg %p163
    $region26: #{basic_conv2d.1} parent=5 // pred_check_branch
      %166 = sbr.rel (%p164) target = $region28
    $region27: #{basic_conv2d.1} parent=5 // pred_region
      // Predicated region
      $region29: #{basic_conv2d.1} parent=27 // pred_check
        %p167 = pneg %p42
      $region30: #{basic_conv2d.1} parent=27 // pred_check_branch
        %169 = sbr.rel (%p167) target = $region32
      $region31: #{basic_conv2d.1} parent=27 // pred_region
        %p170 = scmp.lt.s32.totalorder %s17, 1
        %s171 = scalar_select %p170, %s17, 1
        %s172 = smul.addr %s171, 43
        %s173 = smul.addr %s172, 8
        %s174 = scalar_lea.vmem %s0, %s173
      $region32: #{basic_conv2d.1} parent=27 // pred_fallthru
        _
    $region28: #{basic_conv2d.1} parent=5 // pred_fallthru
      _
    %p175 = scmp.le.s32.totalorder 1, %s10
    %p176 = scmp.lt.s32.totalorder %s10, 5
    %p177 = pnand %p175, %p176
    %p178 = pneg %p177
    // Predicated region
    $region33: #{basic_conv2d.1} parent=5 // pred_check
      _
    $region34: #{basic_conv2d.1} parent=5 // pred_check_branch
      %180 = sbr.rel (%p177) target = $region36
    $region35: #{basic_conv2d.1} parent=5 // pred_region
      %s181 = ssub.s32 %s10, 1
      %p182 = scmp.lt.s32.totalorder %s19, 1
      %s183 = scalar_select %p182, %s19, 1
      %s184 = smul.addr %s183, 43
      %s185 = smul.addr %s184, 8
      %s186 = scalar_lea.vmem %s0, %s185
      %p187 = pneg %p48
      %p188 = pneg %p45
      %p189 = pneg %p69
      %p190 = pneg %p66
      %p191 = pneg %p90
      %p192 = pneg %p87
      %p193 = pneg %p111
      %p194 = pneg %p108
      %p195 = pneg %p139
      %p196 = pneg %p136
      %s197 = smul.u32 18, %s20
      %p198 = scmp.lt.s32.totalorder %s19, 1
      %s199 = scalar_select %p198, %s19, 1
      %p200 = scmp.lt.s32.totalorder %s197, 35
      %s201 = scalar_select %p200, %s197, 35
      %s202 = smul.addr %s199, 36
      %s203 = sadd.s32 %s201, %s202
      %s204 = smul.addr %s203, 8
      %s205 = scalar_lea.vmem %s4, %s204
      %p206 = scmp.lt.s32.totalorder %s19, 1
      %s207 = scalar_select %p206, %s19, 1
      %s208 = smul.addr %s207, 43
      %s209 = smul.addr %s208, 8
      %s210 = scalar_lea.vmem %s0, %s209
      %s211 = smul.u32 18, %s20
      %p212 = scmp.lt.s32.totalorder %s19, 1
      %s213 = scalar_select %p212, %s19, 1
      %p214 = scmp.lt.s32.totalorder %s211, 35
      %s215 = scalar_select %p214, %s211, 35
      %s216 = smul.addr %s213, 36
      %s217 = sadd.s32 %s215, %s216
      %s218 = smul.addr %s217, 8
      %s219 = scalar_lea.vmem %s4, %s218
      %s220 = smul.u32 18, %s20
      %s222 = smul.u32 %s20, 144
      %s223 = scalar_lea.vmem %s210, %s222
      %v224 = vld [vmem:[%s223] sm:$0xff]
      %v225 = vld [vmem:[%s223 + $0x8] sm:$0xff]
      %v226 = vld [vmem:[%s223 + $0x10] sm:$0xff]
      %v227 = vld [vmem:[%s223 + $0x18] sm:$0xff]
      %v228 = vld [vmem:[%s223 + $0x20] sm:$0xff]
      %v229 = vld [vmem:[%s223 + $0x28] sm:$0xff]
      %v230 = vld [vmem:[%s223 + $0x30] sm:$0xff]
      %v231 = vld [vmem:[%s223 + $0x38] sm:$0xff]
      %v232 = vld [vmem:[%s223 + $0x40] sm:$0xff]
      %v233 = vld [vmem:[%s223 + $0x48] sm:$0xff]
      %v234 = vld [vmem:[%s223 + $0x50] sm:$0xff]
      %v235 = vld [vmem:[%s223 + $0x58] sm:$0xff]
      %v236 = vld [vmem:[%s223 + $0x60] sm:$0xff]
      %v237 = vld [vmem:[%s223 + $0x68] sm:$0xff]
      %v238 = vld [vmem:[%s223 + $0x70] sm:$0xff]
      %v239 = vld [vmem:[%s223 + $0x78] sm:$0xff]
      %v240 = vld [vmem:[%s223 + $0x80] sm:$0xff]
      %v241 = vld [vmem:[%s223 + $0x88] sm:$0xff]
      %v242 = vpack.c.bf16 %v225, %v224
      %v243 = vpack.c.bf16 %v227, %v226
      %v244 = vpack.c.bf16 %v229, %v228
      %v245 = vpack.c.bf16 %v231, %v230
      %v246 = vpack.c.bf16 %v233, %v232
      %v247 = vpack.c.bf16 %v235, %v234
      %v248 = vpack.c.bf16 %v237, %v236
      %v249 = vpack.c.bf16 %v239, %v238
      %v250 = vpack.c.bf16 %v241, %v240
      %v251 = vld [vmem:[%s1] sm:$0x3]
      %vm252 = vcmask 31744
      %v254 = vsel %vm252, %v242, 0
      %v257 = vsel %vm252, %v243, 0
      %v260 = vsel %vm252, %v244, 0
      %v263 = vsel %vm252, %v245, 0
      %v266 = vsel %vm252, %v246, 0
      %v269 = vsel %vm252, %v247, 0
      %v272 = vsel %vm252, %v248, 0
      %v275 = vsel %vm252, %v249, 0
      %v278 = vsel %vm252, %v250, 0
      %vm280 = vcmask 1041408
      %v282 = vsel %vm280, %v251, 0
      %284 = vmatprep.subr.bf16.mxu0 0
      %285 = vmatpush1.bf16.msra.mxu0 %v282
      %286 = vmatprep.subr.bf16.mxu0 0
      %287 = vmatpush1.bf16.msra.mxu0 0
      %288 = vmatprep.subr.bf16.mxu0 0
      %289 = vmatpush1.bf16.msra.mxu0 0
      %290 = vmatprep.subr.bf16.mxu0 0
      %291 = vmatpush1.bf16.msra.mxu0 0
      %292 = vmatprep.subr.bf16.mxu0 0
      %293 = vmatpush1.bf16.msra.mxu0 0
      %294 = vmatprep.subr.bf16.mxu0 0
      %295 = vmatpush1.bf16.msra.mxu0 0
      %296 = vmatprep.subr.bf16.mxu0 0
      %297 = vmatpush1.bf16.msra.mxu0 0
      %298 = vmatprep.subr.bf16.mxu0 0
      %299 = vmatpush1.bf16.msra.mxu0 0
      %300 = vmatprep.subr.bf16.mxu0 0
      %301 = vmatpush1.bf16.msra.mxu0 0
      %302 = vmatprep.subr.bf16.mxu0 0
      %303 = vmatpush1.bf16.msra.mxu0 0
      %304 = vmatprep.subr.bf16.mxu0 0
      %305 = vmatpush1.bf16.msra.mxu0 0
      %306 = vmatprep.subr.bf16.mxu0 0
      %307 = vmatpush1.bf16.msra.mxu0 0
      %308 = vmatprep.subr.bf16.mxu0 0
      %309 = vmatpush1.bf16.msra.mxu0 0
      %310 = vmatprep.subr.bf16.mxu0 0
      %311 = vmatpush1.bf16.msra.mxu0 0
      %312 = vmatprep.subr.bf16.mxu0 0
      %313 = vmatpush1.bf16.msra.mxu0 0
      %314 = vmatprep.subr.bf16.mxu0 0
      %315 = vmatpush1.bf16.msra.mxu0 0
      %316 = vmatprep.mubr.bf16.mxu0 0
      %317 = vmatmul.mubr.bf16.gmra.mrb[0].mxu0 %v254
      %v318 = vpop.f32.mrb[0].mxu0
      %v319 = vadd.f32 0.0, %v318
      %v320 = vpop.f32.mrb[0].mxu0
      %v321 = vpop.f32.mrb[0].mxu0
      %v322 = vadd.f32 0.0, %v321
      %v323 = vpop.f32.mrb[0].mxu0
      %324 = vmatprep.mubr.bf16.mxu0 0
      %325 = vmatmul.mubr.bf16.gmra.mrb[0].mxu0 %v257
      %v326 = vpop.f32.mrb[0].mxu0
      %v327 = vadd.f32 0.0, %v326
      %v328 = vpop.f32.mrb[0].mxu0
      %v329 = vpop.f32.mrb[0].mxu0
      %v330 = vadd.f32 0.0, %v329
      %v331 = vpop.f32.mrb[0].mxu0
      %332 = vmatprep.mubr.bf16.mxu0 0
      %333 = vmatmul.mubr.bf16.gmra.mrb[0].mxu0 %v260
      %v334 = vpop.f32.mrb[0].mxu0
      %v335 = vadd.f32 0.0, %v334
      %v336 = vpop.f32.mrb[0].mxu0
      %v337 = vpop.f32.mrb[0].mxu0
      %v338 = vadd.f32 0.0, %v337
      %v339 = vpop.f32.mrb[0].mxu0
      %340 = vmatprep.mubr.bf16.mxu0 0
      %341 = vmatmul.mubr.bf16.gmra.mrb[0].mxu0 %v263
      %v342 = vpop.f32.mrb[0].mxu0
      %v343 = vadd.f32 0.0, %v342
      %v344 = vpop.f32.mrb[0].mxu0
      %v345 = vpop.f32.mrb[0].mxu0
      %v346 = vadd.f32 0.0, %v345
      %v347 = vpop.f32.mrb[0].mxu0
      %348 = vmatprep.mubr.bf16.mxu0 0
      %349 = vmatmul.mubr.bf16.gmra.mrb[0].mxu0 %v266
      %v350 = vpop.f32.mrb[0].mxu0
      %v351 = vadd.f32 0.0, %v350
      %v352 = vpop.f32.mrb[0].mxu0
      %v353 = vpop.f32.mrb[0].mxu0
      %v354 = vadd.f32 0.0, %v353
      %v355 = vpop.f32.mrb[0].mxu0
      %356 = vmatprep.mubr.bf16.mxu0 0
      %357 = vmatmul.mubr.bf16.gmra.mrb[0].mxu0 %v269
      %v358 = vpop.f32.mrb[0].mxu0
      %v359 = vadd.f32 0.0, %v358
      %v360 = vpop.f32.mrb[0].mxu0
      %v361 = vpop.f32.mrb[0].mxu0
      %v362 = vadd.f32 0.0, %v361
      %v363 = vpop.f32.mrb[0].mxu0
      %364 = vmatprep.mubr.bf16.mxu0 0
      %365 = vmatmul.mubr.bf16.gmra.mrb[0].mxu0 %v272
      %v366 = vpop.f32.mrb[0].mxu0
      %v367 = vadd.f32 0.0, %v366
      %v368 = vpop.f32.mrb[0].mxu0
      %v369 = vpop.f32.mrb[0].mxu0
      %v370 = vadd.f32 0.0, %v369
      %v371 = vpop.f32.mrb[0].mxu0
      %372 = vmatprep.mubr.bf16.mxu0 0
      %373 = vmatmul.mubr.bf16.gmra.mrb[0].mxu0 %v275
      %v374 = vpop.f32.mrb[0].mxu0
      %v375 = vadd.f32 0.0, %v374
      %v376 = vpop.f32.mrb[0].mxu0
      %v377 = vpop.f32.mrb[0].mxu0
      %v378 = vadd.f32 0.0, %v377
      %v379 = vpop.f32.mrb[0].mxu0
      %380 = vmatprep.mubr.bf16.mxu0 0
      %381 = vmatmul.mubr.bf16.gmra.mrb[0].mxu0 %v278
      %v382 = vpop.f32.mrb[0].mxu0
      %v383 = vadd.f32 0.0, %v382
      %v384 = vpop.f32.mrb[0].mxu0
      %v385 = vpop.f32.mrb[0].mxu0
      %v386 = vadd.f32 0.0, %v385
      %v387 = vpop.f32.mrb[0].mxu0
      %388 = vdwg.mxu0
      %389 = vst [vmem:[#allocation2] sm:$0xff] %v319
      %390 = vst [vmem:[#allocation2 + $0x8] sm:$0xff] %v322
      %391 = vst [vmem:[#allocation2 + $0x10] sm:$0xff] %v327
      %392 = vst [vmem:[#allocation2 + $0x18] sm:$0xff] %v330
      %393 = vst [vmem:[#allocation2 + $0x20] sm:$0xff] %v335
      %394 = vst [vmem:[#allocation2 + $0x28] sm:$0xff] %v338
      %395 = vst [vmem:[#allocation2 + $0x30] sm:$0xff] %v343
      %396 = vst [vmem:[#allocation2 + $0x38] sm:$0xff] %v346
      %397 = vst [vmem:[#allocation2 + $0x40] sm:$0xff] %v351
      %398 = vst [vmem:[#allocation2 + $0x48] sm:$0xff] %v354
      %399 = vst [vmem:[#allocation2 + $0x50] sm:$0xff] %v359
      %400 = vst [vmem:[#allocation2 + $0x58] sm:$0xff] %v362
      %401 = vst [vmem:[#allocation2 + $0x60] sm:$0xff] %v367
      %402 = vst [vmem:[#allocation2 + $0x68] sm:$0xff] %v370
      %403 = vst [vmem:[#allocation2 + $0x70] sm:$0xff] %v375
      %404 = vst [vmem:[#allocation2 + $0x78] sm:$0xff] %v378
      %405 = vst [vmem:[#allocation2 + $0x80] sm:$0xff] %v383
      %406 = vst [vmem:[#allocation2 + $0x88] sm:$0xff] %v386
      %v407 = vld [vmem:[%s223] sm:$0xff]
      %v408 = vld [vmem:[%s223 + $0x8] sm:$0xff]
      %v409 = vld [vmem:[%s223 + $0x10] sm:$0xff]
      %v410 = vld [vmem:[%s223 + $0x18] sm:$0xff]
      %v411 = vld [vmem:[%s223 + $0x20] sm:$0xff]
      %v412 = vld [vmem:[%s223 + $0x28] sm:$0xff]
      %v413 = vld [vmem:[%s223 + $0x30] sm:$0xff]
      %v414 = vld [vmem:[%s223 + $0x38] sm:$0xff]
      %v415 = vld [vmem:[%s223 + $0x40] sm:$0xff]
      %v416 = vld [vmem:[%s223 + $0x48] sm:$0xff]
      %v417 = vld [vmem:[%s223 + $0x50] sm:$0xff]
      %v418 = vld [vmem:[%s223 + $0x58] sm:$0xff]
      %v419 = vld [vmem:[%s223 + $0x60] sm:$0xff]
      %v420 = vld [vmem:[%s223 + $0x68] sm:$0xff]
      %v421 = vld [vmem:[%s223 + $0x70] sm:$0xff]
      %v422 = vld [vmem:[%s223 + $0x78] sm:$0xff]
      %v423 = vld [vmem:[%s223 + $0x80] sm:$0xff]
      %v424 = vld [vmem:[%s223 + $0x88] sm:$0xff]
      %v425 = vld [vmem:[%s223 + $0x90] sm:$0xff]
      %v426 = vpack.c.bf16 %v408, %v407
      %v427 = vpack.c.bf16 %v410, %v409
      %v428 = vpack.c.bf16 %v412, %v411
      %v429 = vpack.c.bf16 %v414, %v413
      %v430 = vpack.c.bf16 %v416, %v415
      %v431 = vpack.c.bf16 %v418, %v417
      %v432 = vpack.c.bf16 %v420, %v419
      %v433 = vpack.c.bf16 %v422, %v421
      %v434 = vpack.c.bf16 %v424, %v423
      %v435 = vpack.c.bf16 %v425, %v425
      %s436 = scalar_lea.vmem %s1, 2
      %v437 = vld [vmem:[%s436] sm:$0x3]
      %vm438 = vsmask.f32 7424
      %v440 = vshrl.u32 %v426, 16
      %v442 = vshll.u32 %v426, 16
      %v444 = vrot.slane %v442, 1
      %v445 = vor.u32 %v440, %v444
      %v447 = vshll.u32 %v427, 16
      %v449 = vrot.slane %v447, 1
      %v450 = vsel %vm438, %v445, %v449
      %v451 = vshrl.u32 %v427, 16
      %v453 = vor.u32 %v451, %v449
      %v455 = vshll.u32 %v428, 16
      %v457 = vrot.slane %v455, 1
      %v458 = vsel %vm438, %v453, %v457
      %v459 = vshrl.u32 %v428, 16
      %v461 = vor.u32 %v459, %v457
      %v463 = vshll.u32 %v429, 16
      %v465 = vrot.slane %v463, 1
      %v466 = vsel %vm438, %v461, %v465
      %v467 = vshrl.u32 %v429, 16
      %v469 = vor.u32 %v467, %v465
      %v471 = vshll.u32 %v430, 16
      %v473 = vrot.slane %v471, 1
      %v474 = vsel %vm438, %v469, %v473
      %v475 = vshrl.u32 %v430, 16
      %v477 = vor.u32 %v475, %v473
      %v479 = vshll.u32 %v431, 16
      %v481 = vrot.slane %v479, 1
      %v482 = vsel %vm438, %v477, %v481
      %v483 = vshrl.u32 %v431, 16
      %v485 = vor.u32 %v483, %v481
      %v487 = vshll.u32 %v432, 16
      %v489 = vrot.slane %v487, 1
      %v490 = vsel %vm438, %v485, %v489
      %v491 = vshrl.u32 %v432, 16
      %v493 = vor.u32 %v491, %v489
      %v495 = vshll.u32 %v433, 16
      %v497 = vrot.slane %v495, 1
      %v498 = vsel %vm438, %v493, %v497
      %v499 = vshrl.u32 %v433, 16
      %v501 = vor.u32 %v499, %v497
      %v503 = vshll.u32 %v434, 16
      %v505 = vrot.slane %v503, 1
      %v506 = vsel %vm438, %v501, %v505
      %v507 = vshrl.u32 %v434, 16
      %v509 = vor.u32 %v507, %v505
      %v511 = vshll.u32 %v435, 16
      %v513 = vrot.slane %v511, 1
      %v514 = vsel %vm438, %v509, %v513
      %v516 = vsel %vm252, %v450, 0
      %v519 = vsel %vm252, %v458, 0
      %v522 = vsel %vm252, %v466, 0
      %v525 = vsel %vm252, %v474, 0
      %v528 = vsel %vm252, %v482, 0
      %v531 = vsel %vm252, %v490, 0
      %v534 = vsel %vm252, %v498, 0
      %v537 = vsel %vm252, %v506, 0
      %v540 = vsel %vm252, %v514, 0
      %v543 = vsel %vm280, %v437, 0
      %545 = vmatprep.subr.bf16.mxu0 0
      %546 = vmatpush1.bf16.msra.mxu0 %v543
      %547 = vmatprep.subr.bf16.mxu0 0
      %548 = vmatpush1.bf16.msra.mxu0 0
      %549 = vmatprep.subr.bf16.mxu0 0
      %550 = vmatpush1.bf16.msra.mxu0 0
      %551 = vmatprep.subr.bf16.mxu0 0
      %552 = vmatpush1.bf16.msra.mxu0 0
      %553 = vmatprep.subr.bf16.mxu0 0
      %554 = vmatpush1.bf16.msra.mxu0 0
      %555 = vmatprep.subr.bf16.mxu0 0
      %556 = vmatpush1.bf16.msra.mxu0 0
      %557 = vmatprep.subr.bf16.mxu0 0
      %558 = vmatpush1.bf16.msra.mxu0 0
      %559 = vmatprep.subr.bf16.mxu0 0
      %560 = vmatpush1.bf16.msra.mxu0 0
      %561 = vmatprep.subr.bf16.mxu0 0
      %562 = vmatpush1.bf16.msra.mxu0 0
      %563 = vmatprep.subr.bf16.mxu0 0
      %564 = vmatpush1.bf16.msra.mxu0 0
      %565 = vmatprep.subr.bf16.mxu0 0
      %566 = vmatpush1.bf16.msra.mxu0 0
      %567 = vmatprep.subr.bf16.mxu0 0
      %568 = vmatpush1.bf16.msra.mxu0 0
      %569 = vmatprep.subr.bf16.mxu0 0
      %570 = vmatpush1.bf16.msra.mxu0 0
      %571 = vmatprep.subr.bf16.mxu0 0
      %572 = vmatpush1.bf16.msra.mxu0 0
      %573 = vmatprep.subr.bf16.mxu0 0
      %574 = vmatpush1.bf16.msra.mxu0 0
      %575 = vmatprep.subr.bf16.mxu0 0
      %576 = vmatpush1.bf16.msra.mxu0 0
      %577 = vmatprep.mubr.bf16.mxu0 0
      %578 = vmatmul.mubr.bf16.gmra.mrb[0].mxu0 %v516
      %v579 = vpop.f32.mrb[0].mxu0
      %v580 = vadd.f32 0.0, %v579
      %v581 = vpop.f32.mrb[0].mxu0
      %v582 = vpop.f32.mrb[0].mxu0
      %v583 = vadd.f32 0.0, %v582
      %v584 = vpop.f32.mrb[0].mxu0
      %585 = vmatprep.mubr.bf16.mxu0 0
      %586 = vmatmul.mubr.bf16.gmra.mrb[0].mxu0 %v519
      %v587 = vpop.f32.mrb[0].mxu0
      %v588 = vadd.f32 0.0, %v587
      %v589 = vpop.f32.mrb[0].mxu0
      %v590 = vpop.f32.mrb[0].mxu0
      %v591 = vadd.f32 0.0, %v590
      %v592 = vpop.f32.mrb[0].mxu0
      %593 = vmatprep.mubr.bf16.mxu0 0
      %594 = vmatmul.mubr.bf16.gmra.mrb[0].mxu0 %v522
      %v595 = vpop.f32.mrb[0].mxu0
      %v596 = vadd.f32 0.0, %v595
      %v597 = vpop.f32.mrb[0].mxu0
      %v598 = vpop.f32.mrb[0].mxu0
      %v599 = vadd.f32 0.0, %v598
      %v600 = vpop.f32.mrb[0].mxu0
      %601 = vmatprep.mubr.bf16.mxu0 0
      %602 = vmatmul.mubr.bf16.gmra.mrb[0].mxu0 %v525
      %v603 = vpop.f32.mrb[0].mxu0
      %v604 = vadd.f32 0.0, %v603
      %v605 = vpop.f32.mrb[0].mxu0
      %v606 = vpop.f32.mrb[0].mxu0
      %v607 = vadd.f32 0.0, %v606
      %v608 = vpop.f32.mrb[0].mxu0
      %609 = vmatprep.mubr.bf16.mxu0 0
      %610 = vmatmul.mubr.bf16.gmra.mrb[0].mxu0 %v528
      %v611 = vpop.f32.mrb[0].mxu0
      %v612 = vadd.f32 0.0, %v611
      %v613 = vpop.f32.mrb[0].mxu0
      %v614 = vpop.f32.mrb[0].mxu0
      %v615 = vadd.f32 0.0, %v614
      %v616 = vpop.f32.mrb[0].mxu0
      %617 = vmatprep.mubr.bf16.mxu0 0
      %618 = vmatmul.mubr.bf16.gmra.mrb[0].mxu0 %v531
      %v619 = vpop.f32.mrb[0].mxu0
      %v620 = vadd.f32 0.0, %v619
      %v621 = vpop.f32.mrb[0].mxu0
      %v622 = vpop.f32.mrb[0].mxu0
      %v623 = vadd.f32 0.0, %v622
      %v624 = vpop.f32.mrb[0].mxu0
      %625 = vmatprep.mubr.bf16.mxu0 0
      %626 = vmatmul.mubr.bf16.gmra.mrb[0].mxu0 %v534
      %v627 = vpop.f32.mrb[0].mxu0
      %v628 = vadd.f32 0.0, %v627
      %v629 = vpop.f32.mrb[0].mxu0
      %v630 = vpop.f32.mrb[0].mxu0
      %v631 = vadd.f32 0.0, %v630
      %v632 = vpop.f32.mrb[0].mxu0
      %633 = vmatprep.mubr.bf16.mxu0 0
      %634 = vmatmul.mubr.bf16.gmra.mrb[0].mxu0 %v537
      %v635 = vpop.f32.mrb[0].mxu0
      %v636 = vadd.f32 0.0, %v635
      %v637 = vpop.f32.mrb[0].mxu0
      %v638 = vpop.f32.mrb[0].mxu0
      %v639 = vadd.f32 0.0, %v638
      %v640 = vpop.f32.mrb[0].mxu0
      %641 = vmatprep.mubr.bf16.mxu0 0
      %642 = vmatmul.mubr.bf16.gmra.mrb[0].mxu0 %v540
      %v643 = vpop.f32.mrb[0].mxu0
      %v644 = vadd.f32 0.0, %v643
      %v645 = vpop.f32.mrb[0].mxu0
      %v646 = vpop.f32.mrb[0].mxu0
      %v647 = vadd.f32 0.0, %v646
      %v648 = vpop.f32.mrb[0].mxu0
      %649 = vdwg.mxu0
      %v650 = vld [vmem:[#allocation2] sm:$0xff]
      %v651 = vld [vmem:[#allocation2 + $0x8] sm:$0xff]
      %v652 = vld [vmem:[#allocation2 + $0x10] sm:$0xff]
      %v653 = vld [vmem:[#allocation2 + $0x18] sm:$0xff]
      %v654 = vld [vmem:[#allocation2 + $0x20] sm:$0xff]
      %v655 = vld [vmem:[#allocation2 + $0x28] sm:$0xff]
      %v656 = vld [vmem:[#allocation2 + $0x30] sm:$0xff]
      %v657 = vld [vmem:[#allocation2 + $0x38] sm:$0xff]
      %v658 = vld [vmem:[#allocation2 + $0x40] sm:$0xff]
      %v659 = vld [vmem:[#allocation2 + $0x48] sm:$0xff]
      %v660 = vld [vmem:[#allocation2 + $0x50] sm:$0xff]
      %v661 = vld [vmem:[#allocation2 + $0x58] sm:$0xff]
      %v662 = vld [vmem:[#allocation2 + $0x60] sm:$0xff]
      %v663 = vld [vmem:[#allocation2 + $0x68] sm:$0xff]
      %v664 = vld [vmem:[#allocation2 + $0x70] sm:$0xff]
      %v665 = vld [vmem:[#allocation2 + $0x78] sm:$0xff]
      %v666 = vld [vmem:[#allocation2 + $0x80] sm:$0xff]
      %v667 = vld [vmem:[#allocation2 + $0x88] sm:$0xff]
      %v668 = vadd.f32 %v650, %v580
      %v669 = vadd.f32 %v651, %v583
      %v670 = vadd.f32 %v652, %v588
      %v671 = vadd.f32 %v653, %v591
      %v672 = vadd.f32 %v654, %v596
      %v673 = vadd.f32 %v655, %v599
      %v674 = vadd.f32 %v656, %v604
      %v675 = vadd.f32 %v657, %v607
      %v676 = vadd.f32 %v658, %v612
      %v677 = vadd.f32 %v659, %v615
      %v678 = vadd.f32 %v660, %v620
      %v679 = vadd.f32 %v661, %v623
      %v680 = vadd.f32 %v662, %v628
      %v681 = vadd.f32 %v663, %v631
      %v682 = vadd.f32 %v664, %v636
      %v683 = vadd.f32 %v665, %v639
      %v684 = vadd.f32 %v666, %v644
      %v685 = vadd.f32 %v667, %v647
      %686 = vst [vmem:[#allocation2] sm:$0xff] %v668
      %687 = vst [vmem:[#allocation2 + $0x8] sm:$0xff] %v669
      %688 = vst [vmem:[#allocation2 + $0x10] sm:$0xff] %v670
      %689 = vst [vmem:[#allocation2 + $0x18] sm:$0xff] %v671
      %690 = vst [vmem:[#allocation2 + $0x20] sm:$0xff] %v672
      %691 = vst [vmem:[#allocation2 + $0x28] sm:$0xff] %v673
      %692 = vst [vmem:[#allocation2 + $0x30] sm:$0xff] %v674
      %693 = vst [vmem:[#allocation2 + $0x38] sm:$0xff] %v675
      %694 = vst [vmem:[#allocation2 + $0x40] sm:$0xff] %v676
      %695 = vst [vmem:[#allocation2 + $0x48] sm:$0xff] %v677
      %696 = vst [vmem:[#allocation2 + $0x50] sm:$0xff] %v678
      %697 = vst [vmem:[#allocation2 + $0x58] sm:$0xff] %v679
      %698 = vst [vmem:[#allocation2 + $0x60] sm:$0xff] %v680
      %699 = vst [vmem:[#allocation2 + $0x68] sm:$0xff] %v681
      %700 = vst [vmem:[#allocation2 + $0x70] sm:$0xff] %v682
      %701 = vst [vmem:[#allocation2 + $0x78] sm:$0xff] %v683
      %702 = vst [vmem:[#allocation2 + $0x80] sm:$0xff] %v684
      %703 = vst [vmem:[#allocation2 + $0x88] sm:$0xff] %v685
      %v704 = vld [vmem:[%s223] sm:$0xff]
      %v705 = vld [vmem:[%s223 + $0x8] sm:$0xff]
      %v706 = vld [vmem:[%s223 + $0x10] sm:$0xff]
      %v707 = vld [vmem:[%s223 + $0x18] sm:$0xff]
      %v708 = vld [vmem:[%s223 + $0x20] sm:$0xff]
      %v709 = vld [vmem:[%s223 + $0x28] sm:$0xff]
      %v710 = vld [vmem:[%s223 + $0x30] sm:$0xff]
      %v711 = vld [vmem:[%s223 + $0x38] sm:$0xff]
      %v712 = vld [vmem:[%s223 + $0x40] sm:$0xff]
      %v713 = vld [vmem:[%s223 + $0x48] sm:$0xff]
      %v714 = vld [vmem:[%s223 + $0x50] sm:$0xff]
      %v715 = vld [vmem:[%s223 + $0x58] sm:$0xff]
      %v716 = vld [vmem:[%s223 + $0x60] sm:$0xff]
      %v717 = vld [vmem:[%s223 + $0x68] sm:$0xff]
      %v718 = vld [vmem:[%s223 + $0x70] sm:$0xff]
      %v719 = vld [vmem:[%s223 + $0x78] sm:$0xff]
      %v720 = vld [vmem:[%s223 + $0x80] sm:$0xff]
      %v721 = vld [vmem:[%s223 + $0x88] sm:$0xff]
      %v722 = vld [vmem:[%s223 + $0x90] sm:$0xff]
      %v723 = vpack.c.bf16 %v705, %v704
      %v724 = vpack.c.bf16 %v707, %v706
      %v725 = vpack.c.bf16 %v709, %v708
      %v726 = vpack.c.bf16 %v711, %v710
      %v727 = vpack.c.bf16 %v713, %v712
      %v728 = vpack.c.bf16 %v715, %v714
      %v729 = vpack.c.bf16 %v717, %v716
      %v730 = vpack.c.bf16 %v719, %v718
      %v731 = vpack.c.bf16 %v721, %v720
      %v732 = vpack.c.bf16 %v722, %v722
      %s733 = scalar_lea.vmem %s1, 4
      %v734 = vld [vmem:[%s733] sm:$0x3]
      %vm745 = vcmask 1046528
      %v746 = vrot.slane %v723, 1
      %v747 = vrot.slane %v724, 1
      %v748 = vsel %vm745, %v746, %v747
      %v749 = vrot.slane %v725, 1
      %v750 = vsel %vm745, %v747, %v749
      %v751 = vrot.slane %v726, 1
      %v752 = vsel %vm745, %v749, %v751
      %v753 = vrot.slane %v727, 1
      %v754 = vsel %vm745, %v751, %v753
      %v755 = vrot.slane %v728, 1
      %v756 = vsel %vm745, %v753, %v755
      %v757 = vrot.slane %v729, 1
      %v758 = vsel %vm745, %v755, %v757
      %v759 = vrot.slane %v730, 1
      %v760 = vsel %vm745, %v757, %v759
      %v761 = vrot.slane %v731, 1
      %v762 = vsel %vm745, %v759, %v761
      %v763 = vrot.slane %v732, 1
      %v764 = vsel %vm745, %v761, %v763
      %v766 = vsel %vm252, %v748, 0
      %v769 = vsel %vm252, %v750, 0
      %v772 = vsel %vm252, %v752, 0
      %v775 = vsel %vm252, %v754, 0
      %v778 = vsel %vm252, %v756, 0
      %v781 = vsel %vm252, %v758, 0
      %v784 = vsel %vm252, %v760, 0
      %v787 = vsel %vm252, %v762, 0
      %v790 = vsel %vm252, %v764, 0
      %v793 = vsel %vm280, %v734, 0
      %795 = vmatprep.subr.bf16.mxu0 0
      %796 = vmatpush1.bf16.msra.mxu0 %v793
      %797 = vmatprep.subr.bf16.mxu0 0
      %798 = vmatpush1.bf16.msra.mxu0 0
      %799 = vmatprep.subr.bf16.mxu0 0
      %800 = vmatpush1.bf16.msra.mxu0 0
      %801 = vmatprep.subr.bf16.mxu0 0
      %802 = vmatpush1.bf16.msra.mxu0 0
      %803 = vmatprep.subr.bf16.mxu0 0
      %804 = vmatpush1.bf16.msra.mxu0 0
      %805 = vmatprep.subr.bf16.mxu0 0
      %806 = vmatpush1.bf16.msra.mxu0 0
      %807 = vmatprep.subr.bf16.mxu0 0
      %808 = vmatpush1.bf16.msra.mxu0 0
      %809 = vmatprep.subr.bf16.mxu0 0
      %810 = vmatpush1.bf16.msra.mxu0 0
      %811 = vmatprep.subr.bf16.mxu0 0
      %812 = vmatpush1.bf16.msra.mxu0 0
      %813 = vmatprep.subr.bf16.mxu0 0
      %814 = vmatpush1.bf16.msra.mxu0 0
      %815 = vmatprep.subr.bf16.mxu0 0
      %816 = vmatpush1.bf16.msra.mxu0 0
      %817 = vmatprep.subr.bf16.mxu0 0
      %818 = vmatpush1.bf16.msra.mxu0 0
      %819 = vmatprep.subr.bf16.mxu0 0
      %820 = vmatpush1.bf16.msra.mxu0 0
      %821 = vmatprep.subr.bf16.mxu0 0
      %822 = vmatpush1.bf16.msra.mxu0 0
      %823 = vmatprep.subr.bf16.mxu0 0
      %824 = vmatpush1.bf16.msra.mxu0 0
      %825 = vmatprep.subr.bf16.mxu0 0
      %826 = vmatpush1.bf16.msra.mxu0 0
      %827 = vmatprep.mubr.bf16.mxu0 0
      %828 = vmatmul.mubr.bf16.gmra.mrb[0].mxu0 %v766
      %v829 = vpop.f32.mrb[0].mxu0
      %v830 = vadd.f32 0.0, %v829
      %v831 = vpop.f32.mrb[0].mxu0
      %v832 = vpop.f32.mrb[0].mxu0
      %v833 = vadd.f32 0.0, %v832
      %v834 = vpop.f32.mrb[0].mxu0
      %835 = vmatprep.mubr.bf16.mxu0 0
      %836 = vmatmul.mubr.bf16.gmra.mrb[0].mxu0 %v769
      %v837 = vpop.f32.mrb[0].mxu0
      %v838 = vadd.f32 0.0, %v837
      %v839 = vpop.f32.mrb[0].mxu0
      %v840 = vpop.f32.mrb[0].mxu0
      %v841 = vadd.f32 0.0, %v840
      %v842 = vpop.f32.mrb[0].mxu0
      %843 = vmatprep.mubr.bf16.mxu0 0
      %844 = vmatmul.mubr.bf16.gmra.mrb[0].mxu0 %v772
      %v845 = vpop.f32.mrb[0].mxu0
      %v846 = vadd.f32 0.0, %v845
      %v847 = vpop.f32.mrb[0].mxu0
      %v848 = vpop.f32.mrb[0].mxu0
      %v849 = vadd.f32 0.0, %v848
      %v850 = vpop.f32.mrb[0].mxu0
      %851 = vmatprep.mubr.bf16.mxu0 0
      %852 = vmatmul.mubr.bf16.gmra.mrb[0].mxu0 %v775
      %v853 = vpop.f32.mrb[0].mxu0
      %v854 = vadd.f32 0.0, %v853
      %v855 = vpop.f32.mrb[0].mxu0
      %v856 = vpop.f32.mrb[0].mxu0
      %v857 = vadd.f32 0.0, %v856
      %v858 = vpop.f32.mrb[0].mxu0
      %859 = vmatprep.mubr.bf16.mxu0 0
      %860 = vmatmul.mubr.bf16.gmra.mrb[0].mxu0 %v778
      %v861 = vpop.f32.mrb[0].mxu0
      %v862 = vadd.f32 0.0, %v861
      %v863 = vpop.f32.mrb[0].mxu0
      %v864 = vpop.f32.mrb[0].mxu0
      %v865 = vadd.f32 0.0, %v864
      %v866 = vpop.f32.mrb[0].mxu0
      %867 = vmatprep.mubr.bf16.mxu0 0
      %868 = vmatmul.mubr.bf16.gmra.mrb[0].mxu0 %v781
      %v869 = vpop.f32.mrb[0].mxu0
      %v870 = vadd.f32 0.0, %v869
      %v871 = vpop.f32.mrb[0].mxu0
      %v872 = vpop.f32.mrb[0].mxu0
      %v873 = vadd.f32 0.0, %v872
      %v874 = vpop.f32.mrb[0].mxu0
      %875 = vmatprep.mubr.bf16.mxu0 0
      %876 = vmatmul.mubr.bf16.gmra.mrb[0].mxu0 %v784
      %v877 = vpop.f32.mrb[0].mxu0
      %v878 = vadd.f32 0.0, %v877
      %v879 = vpop.f32.mrb[0].mxu0
      %v880 = vpop.f32.mrb[0].mxu0
      %v881 = vadd.f32 0.0, %v880
      %v882 = vpop.f32.mrb[0].mxu0
      %883 = vmatprep.mubr.bf16.mxu0 0
      %884 = vmatmul.mubr.bf16.gmra.mrb[0].mxu0 %v787
      %v885 = vpop.f32.mrb[0].mxu0
      %v886 = vadd.f32 0.0, %v885
      %v887 = vpop.f32.mrb[0].mxu0
      %v888 = vpop.f32.mrb[0].mxu0
      %v889 = vadd.f32 0.0, %v888
      %v890 = vpop.f32.mrb[0].mxu0
      %891 = vmatprep.mubr.bf16.mxu0 0
      %892 = vmatmul.mubr.bf16.gmra.mrb[0].mxu0 %v790
      %v893 = vpop.f32.mrb[0].mxu0
      %v894 = vadd.f32 0.0, %v893
      %v895 = vpop.f32.mrb[0].mxu0
      %v896 = vpop.f32.mrb[0].mxu0
      %v897 = vadd.f32 0.0, %v896
      %v898 = vpop.f32.mrb[0].mxu0
      %899 = vdwg.mxu0
      %v900 = vld [vmem:[#allocation2] sm:$0xff]
      %v901 = vld [vmem:[#allocation2 + $0x8] sm:$0xff]
      %v902 = vld [vmem:[#allocation2 + $0x10] sm:$0xff]
      %v903 = vld [vmem:[#allocation2 + $0x18] sm:$0xff]
      %v904 = vld [vmem:[#allocation2 + $0x20] sm:$0xff]
      %v905 = vld [vmem:[#allocation2 + $0x28] sm:$0xff]
      %v906 = vld [vmem:[#allocation2 + $0x30] sm:$0xff]
      %v907 = vld [vmem:[#allocation2 + $0x38] sm:$0xff]
      %v908 = vld [vmem:[#allocation2 + $0x40] sm:$0xff]
      %v909 = vld [vmem:[#allocation2 + $0x48] sm:$0xff]
      %v910 = vld [vmem:[#allocation2 + $0x50] sm:$0xff]
      %v911 = vld [vmem:[#allocation2 + $0x58] sm:$0xff]
      %v912 = vld [vmem:[#allocation2 + $0x60] sm:$0xff]
      %v913 = vld [vmem:[#allocation2 + $0x68] sm:$0xff]
      %v914 = vld [vmem:[#allocation2 + $0x70] sm:$0xff]
      %v915 = vld [vmem:[#allocation2 + $0x78] sm:$0xff]
      %v916 = vld [vmem:[#allocation2 + $0x80] sm:$0xff]
      %v917 = vld [vmem:[#allocation2 + $0x88] sm:$0xff]
      %v918 = vadd.f32 %v900, %v830
      %v919 = vadd.f32 %v901, %v833
      %v920 = vadd.f32 %v902, %v838
      %v921 = vadd.f32 %v903, %v841
      %v922 = vadd.f32 %v904, %v846
      %v923 = vadd.f32 %v905, %v849
      %v924 = vadd.f32 %v906, %v854
      %v925 = vadd.f32 %v907, %v857
      %v926 = vadd.f32 %v908, %v862
      %v927 = vadd.f32 %v909, %v865
      %v928 = vadd.f32 %v910, %v870
      %v929 = vadd.f32 %v911, %v873
      %v930 = vadd.f32 %v912, %v878
      %v931 = vadd.f32 %v913, %v881
      %v932 = vadd.f32 %v914, %v886
      %v933 = vadd.f32 %v915, %v889
      %v934 = vadd.f32 %v916, %v894
      %v935 = vadd.f32 %v917, %v897
      %936 = vst [vmem:[#allocation2] sm:$0xff] %v918
      %937 = vst [vmem:[#allocation2 + $0x8] sm:$0xff] %v919
      %938 = vst [vmem:[#allocation2 + $0x10] sm:$0xff] %v920
      %939 = vst [vmem:[#allocation2 + $0x18] sm:$0xff] %v921
      %940 = vst [vmem:[#allocation2 + $0x20] sm:$0xff] %v922
      %941 = vst [vmem:[#allocation2 + $0x28] sm:$0xff] %v923
      %942 = vst [vmem:[#allocation2 + $0x30] sm:$0xff] %v924
      %943 = vst [vmem:[#allocation2 + $0x38] sm:$0xff] %v925
      %944 = vst [vmem:[#allocation2 + $0x40] sm:$0xff] %v926
      %945 = vst [vmem:[#allocation2 + $0x48] sm:$0xff] %v927
      %946 = vst [vmem:[#allocation2 + $0x50] sm:$0xff] %v928
      %947 = vst [vmem:[#allocation2 + $0x58] sm:$0xff] %v929
      %948 = vst [vmem:[#allocation2 + $0x60] sm:$0xff] %v930
      %949 = vst [vmem:[#allocation2 + $0x68] sm:$0xff] %v931
      %950 = vst [vmem:[#allocation2 + $0x70] sm:$0xff] %v932
      %951 = vst [vmem:[#allocation2 + $0x78] sm:$0xff] %v933
      %952 = vst [vmem:[#allocation2 + $0x80] sm:$0xff] %v934
      %953 = vst [vmem:[#allocation2 + $0x88] sm:$0xff] %v935
      %s954 = sadd.s32 %s222, 16
      %s955 = scalar_lea.vmem %s210, %s954
      %v956 = vld [vmem:[%s955] sm:$0xff]
      %v957 = vld [vmem:[%s955 + $0x8] sm:$0xff]
      %v958 = vld [vmem:[%s955 + $0x10] sm:$0xff]
      %v959 = vld [vmem:[%s955 + $0x18] sm:$0xff]
      %v960 = vld [vmem:[%s955 + $0x20] sm:$0xff]
      %v961 = vld [vmem:[%s955 + $0x28] sm:$0xff]
      %v962 = vld [vmem:[%s955 + $0x30] sm:$0xff]
      %v963 = vld [vmem:[%s955 + $0x38] sm:$0xff]
      %v964 = vld [vmem:[%s955 + $0x40] sm:$0xff]
      %v965 = vld [vmem:[%s955 + $0x48] sm:$0xff]
      %v966 = vld [vmem:[%s955 + $0x50] sm:$0xff]
      %v967 = vld [vmem:[%s955 + $0x58] sm:$0xff]
      %v968 = vld [vmem:[%s955 + $0x60] sm:$0xff]
      %v969 = vld [vmem:[%s955 + $0x68] sm:$0xff]
      %v970 = vld [vmem:[%s955 + $0x70] sm:$0xff]
      %v971 = vld [vmem:[%s955 + $0x78] sm:$0xff]
      %v972 = vld [vmem:[%s955 + $0x80] sm:$0xff]
      %v973 = vld [vmem:[%s955 + $0x88] sm:$0xff]
      %v974 = vld [vmem:[%s955 + $0x90] sm:$0xff]
      %v975 = vpack.c.bf16 %v957, %v956
      %v976 = vpack.c.bf16 %v959, %v958
      %v977 = vpack.c.bf16 %v961, %v960
      %v978 = vpack.c.bf16 %v963, %v962
      %v979 = vpack.c.bf16 %v965, %v964
      %v980 = vpack.c.bf16 %v967, %v966
      %v981 = vpack.c.bf16 %v969, %v968
      %v982 = vpack.c.bf16 %v971, %v970
      %v983 = vpack.c.bf16 %v973, %v972
      %v984 = vpack.c.bf16 %v974, %v974
      %s985 = scalar_lea.vmem %s1, 6
      %v986 = vld [vmem:[%s985] sm:$0x3]
      %v997 = vrot.slane %v975, 1
      %v998 = vrot.slane %v976, 1
      %v999 = vsel %vm745, %v997, %v998
      %v1000 = vrot.slane %v977, 1
      %v1001 = vsel %vm745, %v998, %v1000
      %v1002 = vrot.slane %v978, 1
      %v1003 = vsel %vm745, %v1000, %v1002
      %v1004 = vrot.slane %v979, 1
      %v1005 = vsel %vm745, %v1002, %v1004
      %v1006 = vrot.slane %v980, 1
      %v1007 = vsel %vm745, %v1004, %v1006
      %v1008 = vrot.slane %v981, 1
      %v1009 = vsel %vm745, %v1006, %v1008
      %v1010 = vrot.slane %v982, 1
      %v1011 = vsel %vm745, %v1008, %v1010
      %v1012 = vrot.slane %v983, 1
      %v1013 = vsel %vm745, %v1010, %v1012
      %v1014 = vrot.slane %v984, 1
      %v1015 = vsel %vm745, %v1012, %v1014
      %v1017 = vsel %vm252, %v999, 0
      %v1020 = vsel %vm252, %v1001, 0
      %v1023 = vsel %vm252, %v1003, 0
      %v1026 = vsel %vm252, %v1005, 0
      %v1029 = vsel %vm252, %v1007, 0
      %v1032 = vsel %vm252, %v1009, 0
      %v1035 = vsel %vm252, %v1011, 0
      %v1038 = vsel %vm252, %v1013, 0
      %v1041 = vsel %vm252, %v1015, 0
      %v1044 = vsel %vm280, %v986, 0
      %1046 = vmatprep.subr.bf16.mxu0 0
      %1047 = vmatpush1.bf16.msra.mxu0 %v1044
      %1048 = vmatprep.subr.bf16.mxu0 0
      %1049 = vmatpush1.bf16.msra.mxu0 0
      %1050 = vmatprep.subr.bf16.mxu0 0
      %1051 = vmatpush1.bf16.msra.mxu0 0
      %1052 = vmatprep.subr.bf16.mxu0 0
      %1053 = vmatpush1.bf16.msra.mxu0 0
      %1054 = vmatprep.subr.bf16.mxu0 0
      %1055 = vmatpush1.bf16.msra.mxu0 0
      %1056 = vmatprep.subr.bf16.mxu0 0
      %1057 = vmatpush1.bf16.msra.mxu0 0
      %1058 = vmatprep.subr.bf16.mxu0 0
      %1059 = vmatpush1.bf16.msra.mxu0 0
      %1060 = vmatprep.subr.bf16.mxu0 0
      %1061 = vmatpush1.bf16.msra.mxu0 0
      %1062 = vmatprep.subr.bf16.mxu0 0
      %1063 = vmatpush1.bf16.msra.mxu0 0
      %1064 = vmatprep.subr.bf16.mxu0 0
      %1065 = vmatpush1.bf16.msra.mxu0 0
      %1066 = vmatprep.subr.bf16.mxu0 0
      %1067 = vmatpush1.bf16.msra.mxu0 0
      %1068 = vmatprep.subr.bf16.mxu0 0
      %1069 = vmatpush1.bf16.msra.mxu0 0
      %1070 = vmatprep.subr.bf16.mxu0 0
      %1071 = vmatpush1.bf16.msra.mxu0 0
      %1072 = vmatprep.subr.bf16.mxu0 0
      %1073 = vmatpush1.bf16.msra.mxu0 0
      %1074 = vmatprep.subr.bf16.mxu0 0
      %1075 = vmatpush1.bf16.msra.mxu0 0
      %1076 = vmatprep.subr.bf16.mxu0 0
      %1077 = vmatpush1.bf16.msra.mxu0 0
      %1078 = vmatprep.mubr.bf16.mxu0 0
      %1079 = vmatmul.mubr.bf16.gmra.mrb[0].mxu0 %v1017
      %v1080 = vpop.f32.mrb[0].mxu0
      %v1081 = vadd.f32 0.0, %v1080
      %v1082 = vpop.f32.mrb[0].mxu0
      %v1083 = vpop.f32.mrb[0].mxu0
      %v1084 = vadd.f32 0.0, %v1083
      %v1085 = vpop.f32.mrb[0].mxu0
      %1086 = vmatprep.mubr.bf16.mxu0 0
      %1087 = vmatmul.mubr.bf16.gmra.mrb[0].mxu0 %v1020
      %v1088 = vpop.f32.mrb[0].mxu0
      %v1089 = vadd.f32 0.0, %v1088
      %v1090 = vpop.f32.mrb[0].mxu0
      %v1091 = vpop.f32.mrb[0].mxu0
      %v1092 = vadd.f32 0.0, %v1091
      %v1093 = vpop.f32.mrb[0].mxu0
      %1094 = vmatprep.mubr.bf16.mxu0 0
      %1095 = vmatmul.mubr.bf16.gmra.mrb[0].mxu0 %v1023
      %v1096 = vpop.f32.mrb[0].mxu0
      %v1097 = vadd.f32 0.0, %v1096
      %v1098 = vpop.f32.mrb[0].mxu0
      %v1099 = vpop.f32.mrb[0].mxu0
      %v1100 = vadd.f32 0.0, %v1099
      %v1101 = vpop.f32.mrb[0].mxu0
      %1102 = vmatprep.mubr.bf16.mxu0 0
      %1103 = vmatmul.mubr.bf16.gmra.mrb[0].mxu0 %v1026
      %v1104 = vpop.f32.mrb[0].mxu0
      %v1105 = vadd.f32 0.0, %v1104
      %v1106 = vpop.f32.mrb[0].mxu0
      %v1107 = vpop.f32.mrb[0].mxu0
      %v1108 = vadd.f32 0.0, %v1107
      %v1109 = vpop.f32.mrb[0].mxu0
      %1110 = vmatprep.mubr.bf16.mxu0 0
      %1111 = vmatmul.mubr.bf16.gmra.mrb[0].mxu0 %v1029
      %v1112 = vpop.f32.mrb[0].mxu0
      %v1113 = vadd.f32 0.0, %v1112
      %v1114 = vpop.f32.mrb[0].mxu0
      %v1115 = vpop.f32.mrb[0].mxu0
      %v1116 = vadd.f32 0.0, %v1115
      %v1117 = vpop.f32.mrb[0].mxu0
      %1118 = vmatprep.mubr.bf16.mxu0 0
      %1119 = vmatmul.mubr.bf16.gmra.mrb[0].mxu0 %v1032
      %v1120 = vpop.f32.mrb[0].mxu0
      %v1121 = vadd.f32 0.0, %v1120
      %v1122 = vpop.f32.mrb[0].mxu0
      %v1123 = vpop.f32.mrb[0].mxu0
      %v1124 = vadd.f32 0.0, %v1123
      %v1125 = vpop.f32.mrb[0].mxu0
      %1126 = vmatprep.mubr.bf16.mxu0 0
      %1127 = vmatmul.mubr.bf16.gmra.mrb[0].mxu0 %v1035
      %v1128 = vpop.f32.mrb[0].mxu0
      %v1129 = vadd.f32 0.0, %v1128
      %v1130 = vpop.f32.mrb[0].mxu0
      %v1131 = vpop.f32.mrb[0].mxu0
      %v1132 = vadd.f32 0.0, %v1131
      %v1133 = vpop.f32.mrb[0].mxu0
      %1134 = vmatprep.mubr.bf16.mxu0 0
      %1135 = vmatmul.mubr.bf16.gmra.mrb[0].mxu0 %v1038
      %v1136 = vpop.f32.mrb[0].mxu0
      %v1137 = vadd.f32 0.0, %v1136
      %v1138 = vpop.f32.mrb[0].mxu0
      %v1139 = vpop.f32.mrb[0].mxu0
      %v1140 = vadd.f32 0.0, %v1139
      %v1141 = vpop.f32.mrb[0].mxu0
      %1142 = vmatprep.mubr.bf16.mxu0 0
      %1143 = vmatmul.mubr.bf16.gmra.mrb[0].mxu0 %v1041
      %v1144 = vpop.f32.mrb[0].mxu0
      %v1145 = vadd.f32 0.0, %v1144
      %v1146 = vpop.f32.mrb[0].mxu0
      %v1147 = vpop.f32.mrb[0].mxu0
      %v1148 = vadd.f32 0.0, %v1147
      %v1149 = vpop.f32.mrb[0].mxu0
      %1150 = vdwg.mxu0
      %v1151 = vld [vmem:[#allocation2] sm:$0xff]
      %v1152 = vld [vmem:[#allocation2 + $0x8] sm:$0xff]
      %v1153 = vld [vmem:[#allocation2 + $0x10] sm:$0xff]
      %v1154 = vld [vmem:[#allocation2 + $0x18] sm:$0xff]
      %v1155 = vld [vmem:[#allocation2 + $0x20] sm:$0xff]
      %v1156 = vld [vmem:[#allocation2 + $0x28] sm:$0xff]
      %v1157 = vld [vmem:[#allocation2 + $0x30] sm:$0xff]
      %v1158 = vld [vmem:[#allocation2 + $0x38] sm:$0xff]
      %v1159 = vld [vmem:[#allocation2 + $0x40] sm:$0xff]
      %v1160 = vld [vmem:[#allocation2 + $0x48] sm:$0xff]
      %v1161 = vld [vmem:[#allocation2 + $0x50] sm:$0xff]
      %v1162 = vld [vmem:[#allocation2 + $0x58] sm:$0xff]
      %v1163 = vld [vmem:[#allocation2 + $0x60] sm:$0xff]
      %v1164 = vld [vmem:[#allocation2 + $0x68] sm:$0xff]
      %v1165 = vld [vmem:[#allocation2 + $0x70] sm:$0xff]
      %v1166 = vld [vmem:[#allocation2 + $0x78] sm:$0xff]
      %v1167 = vld [vmem:[#allocation2 + $0x80] sm:$0xff]
      %v1168 = vld [vmem:[#allocation2 + $0x88] sm:$0xff]
      %v1169 = vadd.f32 %v1151, %v1081
      %v1170 = vadd.f32 %v1152, %v1084
      %v1171 = vadd.f32 %v1153, %v1089
      %v1172 = vadd.f32 %v1154, %v1092
      %v1173 = vadd.f32 %v1155, %v1097
      %v1174 = vadd.f32 %v1156, %v1100
      %v1175 = vadd.f32 %v1157, %v1105
      %v1176 = vadd.f32 %v1158, %v1108
      %v1177 = vadd.f32 %v1159, %v1113
      %v1178 = vadd.f32 %v1160, %v1116
      %v1179 = vadd.f32 %v1161, %v1121
      %v1180 = vadd.f32 %v1162, %v1124
      %v1181 = vadd.f32 %v1163, %v1129
      %v1182 = vadd.f32 %v1164, %v1132
      %v1183 = vadd.f32 %v1165, %v1137
      %v1184 = vadd.f32 %v1166, %v1140
      %v1185 = vadd.f32 %v1167, %v1145
      %v1186 = vadd.f32 %v1168, %v1148
      %1187 = vst [vmem:[#allocation2] sm:$0xff] %v1169
      %1188 = vst [vmem:[#allocation2 + $0x8] sm:$0xff] %v1170
      %1189 = vst [vmem:[#allocation2 + $0x10] sm:$0xff] %v1171
      %1190 = vst [vmem:[#allocation2 + $0x18] sm:$0xff] %v1172
      %1191 = vst [vmem:[#allocation2 + $0x20] sm:$0xff] %v1173
      %1192 = vst [vmem:[#allocation2 + $0x28] sm:$0xff] %v1174
      %1193 = vst [vmem:[#allocation2 + $0x30] sm:$0xff] %v1175
      %1194 = vst [vmem:[#allocation2 + $0x38] sm:$0xff] %v1176
      %1195 = vst [vmem:[#allocation2 + $0x40] sm:$0xff] %v1177
      %1196 = vst [vmem:[#allocation2 + $0x48] sm:$0xff] %v1178
      %1197 = vst [vmem:[#allocation2 + $0x50] sm:$0xff] %v1179
      %1198 = vst [vmem:[#allocation2 + $0x58] sm:$0xff] %v1180
      %1199 = vst [vmem:[#allocation2 + $0x60] sm:$0xff] %v1181
      %1200 = vst [vmem:[#allocation2 + $0x68] sm:$0xff] %v1182
      %1201 = vst [vmem:[#allocation2 + $0x70] sm:$0xff] %v1183
      %1202 = vst [vmem:[#allocation2 + $0x78] sm:$0xff] %v1184
      %1203 = vst [vmem:[#allocation2 + $0x80] sm:$0xff] %v1185
      %1204 = vst [vmem:[#allocation2 + $0x88] sm:$0xff] %v1186
      %v1205 = vld [vmem:[%s955] sm:$0xff]
      %v1206 = vld [vmem:[%s955 + $0x8] sm:$0xff]
      %v1207 = vld [vmem:[%s955 + $0x10] sm:$0xff]
      %v1208 = vld [vmem:[%s955 + $0x18] sm:$0xff]
      %v1209 = vld [vmem:[%s955 + $0x20] sm:$0xff]
      %v1210 = vld [vmem:[%s955 + $0x28] sm:$0xff]
      %v1211 = vld [vmem:[%s955 + $0x30] sm:$0xff]
      %v1212 = vld [vmem:[%s955 + $0x38] sm:$0xff]
      %v1213 = vld [vmem:[%s955 + $0x40] sm:$0xff]
      %v1214 = vld [vmem:[%s955 + $0x48] sm:$0xff]
      %v1215 = vld [vmem:[%s955 + $0x50] sm:$0xff]
      %v1216 = vld [vmem:[%s955 + $0x58] sm:$0xff]
      %v1217 = vld [vmem:[%s955 + $0x60] sm:$0xff]
      %v1218 = vld [vmem:[%s955 + $0x68] sm:$0xff]
      %v1219 = vld [vmem:[%s955 + $0x70] sm:$0xff]
      %v1220 = vld [vmem:[%s955 + $0x78] sm:$0xff]
      %v1221 = vld [vmem:[%s955 + $0x80] sm:$0xff]
      %v1222 = vld [vmem:[%s955 + $0x88] sm:$0xff]
      %v1223 = vld [vmem:[%s955 + $0x90] sm:$0xff]
      %v1224 = vpack.c.bf16 %v1206, %v1205
      %v1225 = vpack.c.bf16 %v1208, %v1207
      %v1226 = vpack.c.bf16 %v1210, %v1209
      %v1227 = vpack.c.bf16 %v1212, %v1211
      %v1228 = vpack.c.bf16 %v1214, %v1213
      %v1229 = vpack.c.bf16 %v1216, %v1215
      %v1230 = vpack.c.bf16 %v1218, %v1217
      %v1231 = vpack.c.bf16 %v1220, %v1219
      %v1232 = vpack.c.bf16 %v1222, %v1221
      %v1233 = vpack.c.bf16 %v1223, %v1223
      %s1234 = scalar_lea.vmem %s1, 8
      %v1235 = vld [vmem:[%s1234] sm:$0x3]
      %vm1236 = vsmask.f32 6400
      %v1238 = vshrl.u32 %v1224, 16
      %v1240 = vrot.slane %v1238, 1
      %v1241 = vshll.u32 %v1224, 16
      %v1243 = vrot.slane %v1241, 2
      %v1244 = vor.u32 %v1240, %v1243
      %v1246 = vshrl.u32 %v1225, 16
      %v1248 = vrot.slane %v1246, 1
      %v1249 = vshll.u32 %v1225, 16
      %v1251 = vrot.slane %v1249, 2
      %v1252 = vor.u32 %v1248, %v1251
      %v1253 = vsel %vm1236, %v1244, %v1252
      %v1255 = vshrl.u32 %v1226, 16
      %v1257 = vrot.slane %v1255, 1
      %v1258 = vshll.u32 %v1226, 16
      %v1260 = vrot.slane %v1258, 2
      %v1261 = vor.u32 %v1257, %v1260
      %v1262 = vsel %vm1236, %v1252, %v1261
      %v1264 = vshrl.u32 %v1227, 16
      %v1266 = vrot.slane %v1264, 1
      %v1267 = vshll.u32 %v1227, 16
      %v1269 = vrot.slane %v1267, 2
      %v1270 = vor.u32 %v1266, %v1269
      %v1271 = vsel %vm1236, %v1261, %v1270
      %v1273 = vshrl.u32 %v1228, 16
      %v1275 = vrot.slane %v1273, 1
      %v1276 = vshll.u32 %v1228, 16
      %v1278 = vrot.slane %v1276, 2
      %v1279 = vor.u32 %v1275, %v1278
      %v1280 = vsel %vm1236, %v1270, %v1279
      %v1282 = vshrl.u32 %v1229, 16
      %v1284 = vrot.slane %v1282, 1
      %v1285 = vshll.u32 %v1229, 16
      %v1287 = vrot.slane %v1285, 2
      %v1288 = vor.u32 %v1284, %v1287
      %v1289 = vsel %vm1236, %v1279, %v1288
      %v1291 = vshrl.u32 %v1230, 16
      %v1293 = vrot.slane %v1291, 1
      %v1294 = vshll.u32 %v1230, 16
      %v1296 = vrot.slane %v1294, 2
      %v1297 = vor.u32 %v1293, %v1296
      %v1298 = vsel %vm1236, %v1288, %v1297
      %v1300 = vshrl.u32 %v1231, 16
      %v1302 = vrot.slane %v1300, 1
      %v1303 = vshll.u32 %v1231, 16
      %v1305 = vrot.slane %v1303, 2
      %v1306 = vor.u32 %v1302, %v1305
      %v1307 = vsel %vm1236, %v1297, %v1306
      %v1309 = vshrl.u32 %v1232, 16
      %v1311 = vrot.slane %v1309, 1
      %v1312 = vshll.u32 %v1232, 16
      %v1314 = vrot.slane %v1312, 2
      %v1315 = vor.u32 %v1311, %v1314
      %v1316 = vsel %vm1236, %v1306, %v1315
      %v1318 = vshrl.u32 %v1233, 16
      %v1320 = vrot.slane %v1318, 1
      %v1321 = vshll.u32 %v1233, 16
      %v1323 = vrot.slane %v1321, 2
      %v1324 = vor.u32 %v1320, %v1323
      %v1325 = vsel %vm1236, %v1315, %v1324
      %v1327 = vsel %vm252, %v1253, 0
      %v1330 = vsel %vm252, %v1262, 0
      %v1333 = vsel %vm252, %v1271, 0
      %v1336 = vsel %vm252, %v1280, 0
      %v1339 = vsel %vm252, %v1289, 0
      %v1342 = vsel %vm252, %v1298, 0
      %v1345 = vsel %vm252, %v1307, 0
      %v1348 = vsel %vm252, %v1316, 0
      %v1351 = vsel %vm252, %v1325, 0
      %v1354 = vsel %vm280, %v1235, 0
      %1356 = vmatprep.subr.bf16.mxu0 0
      %1357 = vmatpush1.bf16.msra.mxu0 %v1354
      %1358 = vmatprep.subr.bf16.mxu0 0
      %1359 = vmatpush1.bf16.msra.mxu0 0
      %1360 = vmatprep.subr.bf16.mxu0 0
      %1361 = vmatpush1.bf16.msra.mxu0 0
      %1362 = vmatprep.subr.bf16.mxu0 0
      %1363 = vmatpush1.bf16.msra.mxu0 0
      %1364 = vmatprep.subr.bf16.mxu0 0
      %1365 = vmatpush1.bf16.msra.mxu0 0
      %1366 = vmatprep.subr.bf16.mxu0 0
      %1367 = vmatpush1.bf16.msra.mxu0 0
      %1368 = vmatprep.subr.bf16.mxu0 0
      %1369 = vmatpush1.bf16.msra.mxu0 0
      %1370 = vmatprep.subr.bf16.mxu0 0
      %1371 = vmatpush1.bf16.msra.mxu0 0
      %1372 = vmatprep.subr.bf16.mxu0 0
      %1373 = vmatpush1.bf16.msra.mxu0 0
      %1374 = vmatprep.subr.bf16.mxu0 0
      %1375 = vmatpush1.bf16.msra.mxu0 0
      %1376 = vmatprep.subr.bf16.mxu0 0
      %1377 = vmatpush1.bf16.msra.mxu0 0
      %1378 = vmatprep.subr.bf16.mxu0 0
      %1379 = vmatpush1.bf16.msra.mxu0 0
      %1380 = vmatprep.subr.bf16.mxu0 0
      %1381 = vmatpush1.bf16.msra.mxu0 0
      %1382 = vmatprep.subr.bf16.mxu0 0
      %1383 = vmatpush1.bf16.msra.mxu0 0
      %1384 = vmatprep.subr.bf16.mxu0 0
      %1385 = vmatpush1.bf16.msra.mxu0 0
      %1386 = vmatprep.subr.bf16.mxu0 0
      %1387 = vmatpush1.bf16.msra.mxu0 0
      %1388 = vmatprep.mubr.bf16.mxu0 0
      %1389 = vmatmul.mubr.bf16.gmra.mrb[0].mxu0 %v1327
      %v1390 = vpop.f32.mrb[0].mxu0
      %v1391 = vadd.f32 0.0, %v1390
      %v1392 = vpop.f32.mrb[0].mxu0
      %v1393 = vpop.f32.mrb[0].mxu0
      %v1394 = vadd.f32 0.0, %v1393
      %v1395 = vpop.f32.mrb[0].mxu0
      %1396 = vmatprep.mubr.bf16.mxu0 0
      %1397 = vmatmul.mubr.bf16.gmra.mrb[0].mxu0 %v1330
      %v1398 = vpop.f32.mrb[0].mxu0
      %v1399 = vadd.f32 0.0, %v1398
      %v1400 = vpop.f32.mrb[0].mxu0
      %v1401 = vpop.f32.mrb[0].mxu0
      %v1402 = vadd.f32 0.0, %v1401
      %v1403 = vpop.f32.mrb[0].mxu0
      %1404 = vmatprep.mubr.bf16.mxu0 0
      %1405 = vmatmul.mubr.bf16.gmra.mrb[0].mxu0 %v1333
      %v1406 = vpop.f32.mrb[0].mxu0
      %v1407 = vadd.f32 0.0, %v1406
      %v1408 = vpop.f32.mrb[0].mxu0
      %v1409 = vpop.f32.mrb[0].mxu0
      %v1410 = vadd.f32 0.0, %v1409
      %v1411 = vpop.f32.mrb[0].mxu0
      %1412 = vmatprep.mubr.bf16.mxu0 0
      %1413 = vmatmul.mubr.bf16.gmra.mrb[0].mxu0 %v1336
      %v1414 = vpop.f32.mrb[0].mxu0
      %v1415 = vadd.f32 0.0, %v1414
      %v1416 = vpop.f32.mrb[0].mxu0
      %v1417 = vpop.f32.mrb[0].mxu0
      %v1418 = vadd.f32 0.0, %v1417
      %v1419 = vpop.f32.mrb[0].mxu0
      %1420 = vmatprep.mubr.bf16.mxu0 0
      %1421 = vmatmul.mubr.bf16.gmra.mrb[0].mxu0 %v1339
      %v1422 = vpop.f32.mrb[0].mxu0
      %v1423 = vadd.f32 0.0, %v1422
      %v1424 = vpop.f32.mrb[0].mxu0
      %v1425 = vpop.f32.mrb[0].mxu0
      %v1426 = vadd.f32 0.0, %v1425
      %v1427 = vpop.f32.mrb[0].mxu0
      %1428 = vmatprep.mubr.bf16.mxu0 0
      %1429 = vmatmul.mubr.bf16.gmra.mrb[0].mxu0 %v1342
      %v1430 = vpop.f32.mrb[0].mxu0
      %v1431 = vadd.f32 0.0, %v1430
      %v1432 = vpop.f32.mrb[0].mxu0
      %v1433 = vpop.f32.mrb[0].mxu0
      %v1434 = vadd.f32 0.0, %v1433
      %v1435 = vpop.f32.mrb[0].mxu0
      %1436 = vmatprep.mubr.bf16.mxu0 0
      %1437 = vmatmul.mubr.bf16.gmra.mrb[0].mxu0 %v1345
      %v1438 = vpop.f32.mrb[0].mxu0
      %v1439 = vadd.f32 0.0, %v1438
      %v1440 = vpop.f32.mrb[0].mxu0
      %v1441 = vpop.f32.mrb[0].mxu0
      %v1442 = vadd.f32 0.0, %v1441
      %v1443 = vpop.f32.mrb[0].mxu0
      %1444 = vmatprep.mubr.bf16.mxu0 0
      %1445 = vmatmul.mubr.bf16.gmra.mrb[0].mxu0 %v1348
      %v1446 = vpop.f32.mrb[0].mxu0
      %v1447 = vadd.f32 0.0, %v1446
      %v1448 = vpop.f32.mrb[0].mxu0
      %v1449 = vpop.f32.mrb[0].mxu0
      %v1450 = vadd.f32 0.0, %v1449
      %v1451 = vpop.f32.mrb[0].mxu0
      %1452 = vmatprep.mubr.bf16.mxu0 0
      %1453 = vmatmul.mubr.bf16.gmra.mrb[0].mxu0 %v1351
      %v1454 = vpop.f32.mrb[0].mxu0
      %v1455 = vadd.f32 0.0, %v1454
      %v1456 = vpop.f32.mrb[0].mxu0
      %v1457 = vpop.f32.mrb[0].mxu0
      %v1458 = vadd.f32 0.0, %v1457
      %v1459 = vpop.f32.mrb[0].mxu0
      %1460 = vdwg.mxu0
      %v1461 = vld [vmem:[#allocation2] sm:$0xff]
      %v1462 = vld [vmem:[#allocation2 + $0x8] sm:$0xff]
      %v1463 = vld [vmem:[#allocation2 + $0x10] sm:$0xff]
      %v1464 = vld [vmem:[#allocation2 + $0x18] sm:$0xff]
      %v1465 = vld [vmem:[#allocation2 + $0x20] sm:$0xff]
      %v1466 = vld [vmem:[#allocation2 + $0x28] sm:$0xff]
      %v1467 = vld [vmem:[#allocation2 + $0x30] sm:$0xff]
      %v1468 = vld [vmem:[#allocation2 + $0x38] sm:$0xff]
      %v1469 = vld [vmem:[#allocation2 + $0x40] sm:$0xff]
      %v1470 = vld [vmem:[#allocation2 + $0x48] sm:$0xff]
      %v1471 = vld [vmem:[#allocation2 + $0x50] sm:$0xff]
      %v1472 = vld [vmem:[#allocation2 + $0x58] sm:$0xff]
      %v1473 = vld [vmem:[#allocation2 + $0x60] sm:$0xff]
      %v1474 = vld [vmem:[#allocation2 + $0x68] sm:$0xff]
      %v1475 = vld [vmem:[#allocation2 + $0x70] sm:$0xff]
      %v1476 = vld [vmem:[#allocation2 + $0x78] sm:$0xff]
      %v1477 = vld [vmem:[#allocation2 + $0x80] sm:$0xff]
      %v1478 = vld [vmem:[#allocation2 + $0x88] sm:$0xff]
      %v1479 = vadd.f32 %v1461, %v1391
      %v1480 = vadd.f32 %v1462, %v1394
      %v1481 = vadd.f32 %v1463, %v1399
      %v1482 = vadd.f32 %v1464, %v1402
      %v1483 = vadd.f32 %v1465, %v1407
      %v1484 = vadd.f32 %v1466, %v1410
      %v1485 = vadd.f32 %v1467, %v1415
      %v1486 = vadd.f32 %v1468, %v1418
      %v1487 = vadd.f32 %v1469, %v1423
      %v1488 = vadd.f32 %v1470, %v1426
      %v1489 = vadd.f32 %v1471, %v1431
      %v1490 = vadd.f32 %v1472, %v1434
      %v1491 = vadd.f32 %v1473, %v1439
      %v1492 = vadd.f32 %v1474, %v1442
      %v1493 = vadd.f32 %v1475, %v1447
      %v1494 = vadd.f32 %v1476, %v1450
      %v1495 = vadd.f32 %v1477, %v1455
      %v1496 = vadd.f32 %v1478, %v1458
      %1497 = vst [vmem:[#allocation2] sm:$0xff] %v1479
      %1498 = vst [vmem:[#allocation2 + $0x8] sm:$0xff] %v1480
      %1499 = vst [vmem:[#allocation2 + $0x10] sm:$0xff] %v1481
      %1500 = vst [vmem:[#allocation2 + $0x18] sm:$0xff] %v1482
      %1501 = vst [vmem:[#allocation2 + $0x20] sm:$0xff] %v1483
      %1502 = vst [vmem:[#allocation2 + $0x28] sm:$0xff] %v1484
      %1503 = vst [vmem:[#allocation2 + $0x30] sm:$0xff] %v1485
      %1504 = vst [vmem:[#allocation2 + $0x38] sm:$0xff] %v1486
      %1505 = vst [vmem:[#allocation2 + $0x40] sm:$0xff] %v1487
      %1506 = vst [vmem:[#allocation2 + $0x48] sm:$0xff] %v1488
      %1507 = vst [vmem:[#allocation2 + $0x50] sm:$0xff] %v1489
      %1508 = vst [vmem:[#allocation2 + $0x58] sm:$0xff] %v1490
      %1509 = vst [vmem:[#allocation2 + $0x60] sm:$0xff] %v1491
      %1510 = vst [vmem:[#allocation2 + $0x68] sm:$0xff] %v1492
      %1511 = vst [vmem:[#allocation2 + $0x70] sm:$0xff] %v1493
      %1512 = vst [vmem:[#allocation2 + $0x78] sm:$0xff] %v1494
      %1513 = vst [vmem:[#allocation2 + $0x80] sm:$0xff] %v1495
      %1514 = vst [vmem:[#allocation2 + $0x88] sm:$0xff] %v1496
      %v1515 = vld [vmem:[%s955] sm:$0xff]
      %v1516 = vld [vmem:[%s955 + $0x8] sm:$0xff]
      %v1517 = vld [vmem:[%s955 + $0x10] sm:$0xff]
      %v1518 = vld [vmem:[%s955 + $0x18] sm:$0xff]
      %v1519 = vld [vmem:[%s955 + $0x20] sm:$0xff]
      %v1520 = vld [vmem:[%s955 + $0x28] sm:$0xff]
      %v1521 = vld [vmem:[%s955 + $0x30] sm:$0xff]
      %v1522 = vld [vmem:[%s955 + $0x38] sm:$0xff]
      %v1523 = vld [vmem:[%s955 + $0x40] sm:$0xff]
      %v1524 = vld [vmem:[%s955 + $0x48] sm:$0xff]
      %v1525 = vld [vmem:[%s955 + $0x50] sm:$0xff]
      %v1526 = vld [vmem:[%s955 + $0x58] sm:$0xff]
      %v1527 = vld [vmem:[%s955 + $0x60] sm:$0xff]
      %v1528 = vld [vmem:[%s955 + $0x68] sm:$0xff]
      %v1529 = vld [vmem:[%s955 + $0x70] sm:$0xff]
      %v1530 = vld [vmem:[%s955 + $0x78] sm:$0xff]
      %v1531 = vld [vmem:[%s955 + $0x80] sm:$0xff]
      %v1532 = vld [vmem:[%s955 + $0x88] sm:$0xff]
      %v1533 = vld [vmem:[%s955 + $0x90] sm:$0xff]
      %v1534 = vpack.c.bf16 %v1516, %v1515
      %v1535 = vpack.c.bf16 %v1518, %v1517
      %v1536 = vpack.c.bf16 %v1520, %v1519
      %v1537 = vpack.c.bf16 %v1522, %v1521
      %v1538 = vpack.c.bf16 %v1524, %v1523
      %v1539 = vpack.c.bf16 %v1526, %v1525
      %v1540 = vpack.c.bf16 %v1528, %v1527
      %v1541 = vpack.c.bf16 %v1530, %v1529
      %v1542 = vpack.c.bf16 %v1532, %v1531
      %v1543 = vpack.c.bf16 %v1533, %v1533
      %s1544 = scalar_lea.vmem %s1, 10
      %v1545 = vld [vmem:[%s1544] sm:$0x3]
      %vm1556 = vcmask 1045504
      %v1557 = vrot.slane %v1534, 2
      %v1558 = vrot.slane %v1535, 2
      %v1559 = vsel %vm1556, %v1557, %v1558
      %v1560 = vrot.slane %v1536, 2
      %v1561 = vsel %vm1556, %v1558, %v1560
      %v1562 = vrot.slane %v1537, 2
      %v1563 = vsel %vm1556, %v1560, %v1562
      %v1564 = vrot.slane %v1538, 2
      %v1565 = vsel %vm1556, %v1562, %v1564
      %v1566 = vrot.slane %v1539, 2
      %v1567 = vsel %vm1556, %v1564, %v1566
      %v1568 = vrot.slane %v1540, 2
      %v1569 = vsel %vm1556, %v1566, %v1568
      %v1570 = vrot.slane %v1541, 2
      %v1571 = vsel %vm1556, %v1568, %v1570
      %v1572 = vrot.slane %v1542, 2
      %v1573 = vsel %vm1556, %v1570, %v1572
      %v1574 = vrot.slane %v1543, 2
      %v1575 = vsel %vm1556, %v1572, %v1574
      %v1577 = vsel %vm252, %v1559, 0
      %v1580 = vsel %vm252, %v1561, 0
      %v1583 = vsel %vm252, %v1563, 0
      %v1586 = vsel %vm252, %v1565, 0
      %v1589 = vsel %vm252, %v1567, 0
      %v1592 = vsel %vm252, %v1569, 0
      %v1595 = vsel %vm252, %v1571, 0
      %v1598 = vsel %vm252, %v1573, 0
      %v1601 = vsel %vm252, %v1575, 0
      %v1604 = vsel %vm280, %v1545, 0
      %1606 = vmatprep.subr.bf16.mxu0 0
      %1607 = vmatpush1.bf16.msra.mxu0 %v1604
      %1608 = vmatprep.subr.bf16.mxu0 0
      %1609 = vmatpush1.bf16.msra.mxu0 0
      %1610 = vmatprep.subr.bf16.mxu0 0
      %1611 = vmatpush1.bf16.msra.mxu0 0
      %1612 = vmatprep.subr.bf16.mxu0 0
      %1613 = vmatpush1.bf16.msra.mxu0 0
      %1614 = vmatprep.subr.bf16.mxu0 0
      %1615 = vmatpush1.bf16.msra.mxu0 0
      %1616 = vmatprep.subr.bf16.mxu0 0
      %1617 = vmatpush1.bf16.msra.mxu0 0
      %1618 = vmatprep.subr.bf16.mxu0 0
      %1619 = vmatpush1.bf16.msra.mxu0 0
      %1620 = vmatprep.subr.bf16.mxu0 0
      %1621 = vmatpush1.bf16.msra.mxu0 0
      %1622 = vmatprep.subr.bf16.mxu0 0
      %1623 = vmatpush1.bf16.msra.mxu0 0
      %1624 = vmatprep.subr.bf16.mxu0 0
      %1625 = vmatpush1.bf16.msra.mxu0 0
      %1626 = vmatprep.subr.bf16.mxu0 0
      %1627 = vmatpush1.bf16.msra.mxu0 0
      %1628 = vmatprep.subr.bf16.mxu0 0
      %1629 = vmatpush1.bf16.msra.mxu0 0
      %1630 = vmatprep.subr.bf16.mxu0 0
      %1631 = vmatpush1.bf16.msra.mxu0 0
      %1632 = vmatprep.subr.bf16.mxu0 0
      %1633 = vmatpush1.bf16.msra.mxu0 0
      %1634 = vmatprep.subr.bf16.mxu0 0
      %1635 = vmatpush1.bf16.msra.mxu0 0
      %1636 = vmatprep.subr.bf16.mxu0 0
      %1637 = vmatpush1.bf16.msra.mxu0 0
      %1638 = vmatprep.mubr.bf16.mxu0 0
      %1639 = vmatmul.mubr.bf16.gmra.mrb[0].mxu0 %v1577
      %v1640 = vpop.f32.mrb[0].mxu0
      %v1641 = vadd.f32 0.0, %v1640
      %v1642 = vpop.f32.mrb[0].mxu0
      %v1643 = vpop.f32.mrb[0].mxu0
      %v1644 = vadd.f32 0.0, %v1643
      %v1645 = vpop.f32.mrb[0].mxu0
      %1646 = vmatprep.mubr.bf16.mxu0 0
      %1647 = vmatmul.mubr.bf16.gmra.mrb[0].mxu0 %v1580
      %v1648 = vpop.f32.mrb[0].mxu0
      %v1649 = vadd.f32 0.0, %v1648
      %v1650 = vpop.f32.mrb[0].mxu0
      %v1651 = vpop.f32.mrb[0].mxu0
      %v1652 = vadd.f32 0.0, %v1651
      %v1653 = vpop.f32.mrb[0].mxu0
      %1654 = vmatprep.mubr.bf16.mxu0 0
      %1655 = vmatmul.mubr.bf16.gmra.mrb[0].mxu0 %v1583
      %v1656 = vpop.f32.mrb[0].mxu0
      %v1657 = vadd.f32 0.0, %v1656
      %v1658 = vpop.f32.mrb[0].mxu0
      %v1659 = vpop.f32.mrb[0].mxu0
      %v1660 = vadd.f32 0.0, %v1659
      %v1661 = vpop.f32.mrb[0].mxu0
      %1662 = vmatprep.mubr.bf16.mxu0 0
      %1663 = vmatmul.mubr.bf16.gmra.mrb[0].mxu0 %v1586
      %v1664 = vpop.f32.mrb[0].mxu0
      %v1665 = vadd.f32 0.0, %v1664
      %v1666 = vpop.f32.mrb[0].mxu0
      %v1667 = vpop.f32.mrb[0].mxu0
      %v1668 = vadd.f32 0.0, %v1667
      %v1669 = vpop.f32.mrb[0].mxu0
      %1670 = vmatprep.mubr.bf16.mxu0 0
      %1671 = vmatmul.mubr.bf16.gmra.mrb[0].mxu0 %v1589
      %v1672 = vpop.f32.mrb[0].mxu0
      %v1673 = vadd.f32 0.0, %v1672
      %v1674 = vpop.f32.mrb[0].mxu0
      %v1675 = vpop.f32.mrb[0].mxu0
      %v1676 = vadd.f32 0.0, %v1675
      %v1677 = vpop.f32.mrb[0].mxu0
      %1678 = vmatprep.mubr.bf16.mxu0 0
      %1679 = vmatmul.mubr.bf16.gmra.mrb[0].mxu0 %v1592
      %v1680 = vpop.f32.mrb[0].mxu0
      %v1681 = vadd.f32 0.0, %v1680
      %v1682 = vpop.f32.mrb[0].mxu0
      %v1683 = vpop.f32.mrb[0].mxu0
      %v1684 = vadd.f32 0.0, %v1683
      %v1685 = vpop.f32.mrb[0].mxu0
      %1686 = vmatprep.mubr.bf16.mxu0 0
      %1687 = vmatmul.mubr.bf16.gmra.mrb[0].mxu0 %v1595
      %v1688 = vpop.f32.mrb[0].mxu0
      %v1689 = vadd.f32 0.0, %v1688
      %v1690 = vpop.f32.mrb[0].mxu0
      %v1691 = vpop.f32.mrb[0].mxu0
      %v1692 = vadd.f32 0.0, %v1691
      %v1693 = vpop.f32.mrb[0].mxu0
      %1694 = vmatprep.mubr.bf16.mxu0 0
      %1695 = vmatmul.mubr.bf16.gmra.mrb[0].mxu0 %v1598
      %v1696 = vpop.f32.mrb[0].mxu0
      %v1697 = vadd.f32 0.0, %v1696
      %v1698 = vpop.f32.mrb[0].mxu0
      %v1699 = vpop.f32.mrb[0].mxu0
      %v1700 = vadd.f32 0.0, %v1699
      %v1701 = vpop.f32.mrb[0].mxu0
      %1702 = vmatprep.mubr.bf16.mxu0 0
      %1703 = vmatmul.mubr.bf16.gmra.mrb[0].mxu0 %v1601
      %v1704 = vpop.f32.mrb[0].mxu0
      %v1705 = vadd.f32 0.0, %v1704
      %v1706 = vpop.f32.mrb[0].mxu0
      %v1707 = vpop.f32.mrb[0].mxu0
      %v1708 = vadd.f32 0.0, %v1707
      %v1709 = vpop.f32.mrb[0].mxu0
      %1710 = vdwg.mxu0
      %v1711 = vld [vmem:[#allocation2] sm:$0xff]
      %v1712 = vld [vmem:[#allocation2 + $0x8] sm:$0xff]
      %v1713 = vld [vmem:[#allocation2 + $0x10] sm:$0xff]
      %v1714 = vld [vmem:[#allocation2 + $0x18] sm:$0xff]
      %v1715 = vld [vmem:[#allocation2 + $0x20] sm:$0xff]
      %v1716 = vld [vmem:[#allocation2 + $0x28] sm:$0xff]
      %v1717 = vld [vmem:[#allocation2 + $0x30] sm:$0xff]
      %v1718 = vld [vmem:[#allocation2 + $0x38] sm:$0xff]
      %v1719 = vld [vmem:[#allocation2 + $0x40] sm:$0xff]
      %v1720 = vld [vmem:[#allocation2 + $0x48] sm:$0xff]
      %v1721 = vld [vmem:[#allocation2 + $0x50] sm:$0xff]
      %v1722 = vld [vmem:[#allocation2 + $0x58] sm:$0xff]
      %v1723 = vld [vmem:[#allocation2 + $0x60] sm:$0xff]
      %v1724 = vld [vmem:[#allocation2 + $0x68] sm:$0xff]
      %v1725 = vld [vmem:[#allocation2 + $0x70] sm:$0xff]
      %v1726 = vld [vmem:[#allocation2 + $0x78] sm:$0xff]
      %v1727 = vld [vmem:[#allocation2 + $0x80] sm:$0xff]
      %v1728 = vld [vmem:[#allocation2 + $0x88] sm:$0xff]
      %v1729 = vadd.f32 %v1711, %v1641
      %v1730 = vadd.f32 %v1712, %v1644
      %v1731 = vadd.f32 %v1713, %v1649
      %v1732 = vadd.f32 %v1714, %v1652
      %v1733 = vadd.f32 %v1715, %v1657
      %v1734 = vadd.f32 %v1716, %v1660
      %v1735 = vadd.f32 %v1717, %v1665
      %v1736 = vadd.f32 %v1718, %v1668
      %v1737 = vadd.f32 %v1719, %v1673
      %v1738 = vadd.f32 %v1720, %v1676
      %v1739 = vadd.f32 %v1721, %v1681
      %v1740 = vadd.f32 %v1722, %v1684
      %v1741 = vadd.f32 %v1723, %v1689
      %v1742 = vadd.f32 %v1724, %v1692
      %v1743 = vadd.f32 %v1725, %v1697
      %v1744 = vadd.f32 %v1726, %v1700
      %v1745 = vadd.f32 %v1727, %v1705
      %v1746 = vadd.f32 %v1728, %v1708
      %1747 = vst [vmem:[#allocation2] sm:$0xff] %v1729
      %1748 = vst [vmem:[#allocation2 + $0x8] sm:$0xff] %v1730
      %1749 = vst [vmem:[#allocation2 + $0x10] sm:$0xff] %v1731
      %1750 = vst [vmem:[#allocation2 + $0x18] sm:$0xff] %v1732
      %1751 = vst [vmem:[#allocation2 + $0x20] sm:$0xff] %v1733
      %1752 = vst [vmem:[#allocation2 + $0x28] sm:$0xff] %v1734
      %1753 = vst [vmem:[#allocation2 + $0x30] sm:$0xff] %v1735
      %1754 = vst [vmem:[#allocation2 + $0x38] sm:$0xff] %v1736
      %1755 = vst [vmem:[#allocation2 + $0x40] sm:$0xff] %v1737
      %1756 = vst [vmem:[#allocation2 + $0x48] sm:$0xff] %v1738
      %1757 = vst [vmem:[#allocation2 + $0x50] sm:$0xff] %v1739
      %1758 = vst [vmem:[#allocation2 + $0x58] sm:$0xff] %v1740
      %1759 = vst [vmem:[#allocation2 + $0x60] sm:$0xff] %v1741
      %1760 = vst [vmem:[#allocation2 + $0x68] sm:$0xff] %v1742
      %1761 = vst [vmem:[#allocation2 + $0x70] sm:$0xff] %v1743
      %1762 = vst [vmem:[#allocation2 + $0x78] sm:$0xff] %v1744
      %1763 = vst [vmem:[#allocation2 + $0x80] sm:$0xff] %v1745
      %1764 = vst [vmem:[#allocation2 + $0x88] sm:$0xff] %v1746
      %s1765 = sadd.s32 %s222, 32
      %s1766 = scalar_lea.vmem %s210, %s1765
      %v1767 = vld [vmem:[%s1766] sm:$0xff]
      %v1768 = vld [vmem:[%s1766 + $0x8] sm:$0xff]
      %v1769 = vld [vmem:[%s1766 + $0x10] sm:$0xff]
      %v1770 = vld [vmem:[%s1766 + $0x18] sm:$0xff]
      %v1771 = vld [vmem:[%s1766 + $0x20] sm:$0xff]
      %v1772 = vld [vmem:[%s1766 + $0x28] sm:$0xff]
      %v1773 = vld [vmem:[%s1766 + $0x30] sm:$0xff]
      %v1774 = vld [vmem:[%s1766 + $0x38] sm:$0xff]
      %v1775 = vld [vmem:[%s1766 + $0x40] sm:$0xff]
      %v1776 = vld [vmem:[%s1766 + $0x48] sm:$0xff]
      %v1777 = vld [vmem:[%s1766 + $0x50] sm:$0xff]
      %v1778 = vld [vmem:[%s1766 + $0x58] sm:$0xff]
      %v1779 = vld [vmem:[%s1766 + $0x60] sm:$0xff]
      %v1780 = vld [vmem:[%s1766 + $0x68] sm:$0xff]
      %v1781 = vld [vmem:[%s1766 + $0x70] sm:$0xff]
      %v1782 = vld [vmem:[%s1766 + $0x78] sm:$0xff]
      %v1783 = vld [vmem:[%s1766 + $0x80] sm:$0xff]
      %v1784 = vld [vmem:[%s1766 + $0x88] sm:$0xff]
      %v1785 = vld [vmem:[%s1766 + $0x90] sm:$0xff]
      %v1786 = vpack.c.bf16 %v1768, %v1767
      %v1787 = vpack.c.bf16 %v1770, %v1769
      %v1788 = vpack.c.bf16 %v1772, %v1771
      %v1789 = vpack.c.bf16 %v1774, %v1773
      %v1790 = vpack.c.bf16 %v1776, %v1775
      %v1791 = vpack.c.bf16 %v1778, %v1777
      %v1792 = vpack.c.bf16 %v1780, %v1779
      %v1793 = vpack.c.bf16 %v1782, %v1781
      %v1794 = vpack.c.bf16 %v1784, %v1783
      %v1795 = vpack.c.bf16 %v1785, %v1785
      %s1796 = scalar_lea.vmem %s1, 12
      %v1797 = vld [vmem:[%s1796] sm:$0x3]
      %v1808 = vrot.slane %v1786, 2
      %v1809 = vrot.slane %v1787, 2
      %v1810 = vsel %vm1556, %v1808, %v1809
      %v1811 = vrot.slane %v1788, 2
      %v1812 = vsel %vm1556, %v1809, %v1811
      %v1813 = vrot.slane %v1789, 2
      %v1814 = vsel %vm1556, %v1811, %v1813
      %v1815 = vrot.slane %v1790, 2
      %v1816 = vsel %vm1556, %v1813, %v1815
      %v1817 = vrot.slane %v1791, 2
      %v1818 = vsel %vm1556, %v1815, %v1817
      %v1819 = vrot.slane %v1792, 2
      %v1820 = vsel %vm1556, %v1817, %v1819
      %v1821 = vrot.slane %v1793, 2
      %v1822 = vsel %vm1556, %v1819, %v1821
      %v1823 = vrot.slane %v1794, 2
      %v1824 = vsel %vm1556, %v1821, %v1823
      %v1825 = vrot.slane %v1795, 2
      %v1826 = vsel %vm1556, %v1823, %v1825
      %v1828 = vsel %vm252, %v1810, 0
      %v1831 = vsel %vm252, %v1812, 0
      %v1834 = vsel %vm252, %v1814, 0
      %v1837 = vsel %vm252, %v1816, 0
      %v1840 = vsel %vm252, %v1818, 0
      %v1843 = vsel %vm252, %v1820, 0
      %v1846 = vsel %vm252, %v1822, 0
      %v1849 = vsel %vm252, %v1824, 0
      %v1852 = vsel %vm252, %v1826, 0
      %v1855 = vsel %vm280, %v1797, 0
      %1857 = vmatprep.subr.bf16.mxu0 0
      %1858 = vmatpush1.bf16.msra.mxu0 %v1855
      %1859 = vmatprep.subr.bf16.mxu0 0
      %1860 = vmatpush1.bf16.msra.mxu0 0
      %1861 = vmatprep.subr.bf16.mxu0 0
      %1862 = vmatpush1.bf16.msra.mxu0 0
      %1863 = vmatprep.subr.bf16.mxu0 0
      %1864 = vmatpush1.bf16.msra.mxu0 0
      %1865 = vmatprep.subr.bf16.mxu0 0
      %1866 = vmatpush1.bf16.msra.mxu0 0
      %1867 = vmatprep.subr.bf16.mxu0 0
      %1868 = vmatpush1.bf16.msra.mxu0 0
      %1869 = vmatprep.subr.bf16.mxu0 0
      %1870 = vmatpush1.bf16.msra.mxu0 0
      %1871 = vmatprep.subr.bf16.mxu0 0
      %1872 = vmatpush1.bf16.msra.mxu0 0
      %1873 = vmatprep.subr.bf16.mxu0 0
      %1874 = vmatpush1.bf16.msra.mxu0 0
      %1875 = vmatprep.subr.bf16.mxu0 0
      %1876 = vmatpush1.bf16.msra.mxu0 0
      %1877 = vmatprep.subr.bf16.mxu0 0
      %1878 = vmatpush1.bf16.msra.mxu0 0
      %1879 = vmatprep.subr.bf16.mxu0 0
      %1880 = vmatpush1.bf16.msra.mxu0 0
      %1881 = vmatprep.subr.bf16.mxu0 0
      %1882 = vmatpush1.bf16.msra.mxu0 0
      %1883 = vmatprep.subr.bf16.mxu0 0
      %1884 = vmatpush1.bf16.msra.mxu0 0
      %1885 = vmatprep.subr.bf16.mxu0 0
      %1886 = vmatpush1.bf16.msra.mxu0 0
      %1887 = vmatprep.subr.bf16.mxu0 0
      %1888 = vmatpush1.bf16.msra.mxu0 0
      %1889 = vmatprep.mubr.bf16.mxu0 0
      %1890 = vmatmul.mubr.bf16.gmra.mrb[0].mxu0 %v1828
      %v1891 = vpop.f32.mrb[0].mxu0
      %v1892 = vadd.f32 0.0, %v1891
      %v1893 = vpop.f32.mrb[0].mxu0
      %v1894 = vpop.f32.mrb[0].mxu0
      %v1895 = vadd.f32 0.0, %v1894
      %v1896 = vpop.f32.mrb[0].mxu0
      %1897 = vmatprep.mubr.bf16.mxu0 0
      %1898 = vmatmul.mubr.bf16.gmra.mrb[0].mxu0 %v1831
      %v1899 = vpop.f32.mrb[0].mxu0
      %v1900 = vadd.f32 0.0, %v1899
      %v1901 = vpop.f32.mrb[0].mxu0
      %v1902 = vpop.f32.mrb[0].mxu0
      %v1903 = vadd.f32 0.0, %v1902
      %v1904 = vpop.f32.mrb[0].mxu0
      %1905 = vmatprep.mubr.bf16.mxu0 0
      %1906 = vmatmul.mubr.bf16.gmra.mrb[0].mxu0 %v1834
      %v1907 = vpop.f32.mrb[0].mxu0
      %v1908 = vadd.f32 0.0, %v1907
      %v1909 = vpop.f32.mrb[0].mxu0
      %v1910 = vpop.f32.mrb[0].mxu0
      %v1911 = vadd.f32 0.0, %v1910
      %v1912 = vpop.f32.mrb[0].mxu0
      %1913 = vmatprep.mubr.bf16.mxu0 0
      %1914 = vmatmul.mubr.bf16.gmra.mrb[0].mxu0 %v1837
      %v1915 = vpop.f32.mrb[0].mxu0
      %v1916 = vadd.f32 0.0, %v1915
      %v1917 = vpop.f32.mrb[0].mxu0
      %v1918 = vpop.f32.mrb[0].mxu0
      %v1919 = vadd.f32 0.0, %v1918
      %v1920 = vpop.f32.mrb[0].mxu0
      %1921 = vmatprep.mubr.bf16.mxu0 0
      %1922 = vmatmul.mubr.bf16.gmra.mrb[0].mxu0 %v1840
      %v1923 = vpop.f32.mrb[0].mxu0
      %v1924 = vadd.f32 0.0, %v1923
      %v1925 = vpop.f32.mrb[0].mxu0
      %v1926 = vpop.f32.mrb[0].mxu0
      %v1927 = vadd.f32 0.0, %v1926
      %v1928 = vpop.f32.mrb[0].mxu0
      %1929 = vmatprep.mubr.bf16.mxu0 0
      %1930 = vmatmul.mubr.bf16.gmra.mrb[0].mxu0 %v1843
      %v1931 = vpop.f32.mrb[0].mxu0
      %v1932 = vadd.f32 0.0, %v1931
      %v1933 = vpop.f32.mrb[0].mxu0
      %v1934 = vpop.f32.mrb[0].mxu0
      %v1935 = vadd.f32 0.0, %v1934
      %v1936 = vpop.f32.mrb[0].mxu0
      %1937 = vmatprep.mubr.bf16.mxu0 0
      %1938 = vmatmul.mubr.bf16.gmra.mrb[0].mxu0 %v1846
      %v1939 = vpop.f32.mrb[0].mxu0
      %v1940 = vadd.f32 0.0, %v1939
      %v1941 = vpop.f32.mrb[0].mxu0
      %v1942 = vpop.f32.mrb[0].mxu0
      %v1943 = vadd.f32 0.0, %v1942
      %v1944 = vpop.f32.mrb[0].mxu0
      %1945 = vmatprep.mubr.bf16.mxu0 0
      %1946 = vmatmul.mubr.bf16.gmra.mrb[0].mxu0 %v1849
      %v1947 = vpop.f32.mrb[0].mxu0
      %v1948 = vadd.f32 0.0, %v1947
      %v1949 = vpop.f32.mrb[0].mxu0
      %v1950 = vpop.f32.mrb[0].mxu0
      %v1951 = vadd.f32 0.0, %v1950
      %v1952 = vpop.f32.mrb[0].mxu0
      %1953 = vmatprep.mubr.bf16.mxu0 0
      %1954 = vmatmul.mubr.bf16.gmra.mrb[0].mxu0 %v1852
      %v1955 = vpop.f32.mrb[0].mxu0
      %v1956 = vadd.f32 0.0, %v1955
      %v1957 = vpop.f32.mrb[0].mxu0
      %v1958 = vpop.f32.mrb[0].mxu0
      %v1959 = vadd.f32 0.0, %v1958
      %v1960 = vpop.f32.mrb[0].mxu0
      %1961 = vdwg.mxu0
      %v1962 = vld [vmem:[#allocation2] sm:$0xff]
      %v1963 = vld [vmem:[#allocation2 + $0x8] sm:$0xff]
      %v1964 = vld [vmem:[#allocation2 + $0x10] sm:$0xff]
      %v1965 = vld [vmem:[#allocation2 + $0x18] sm:$0xff]
      %v1966 = vld [vmem:[#allocation2 + $0x20] sm:$0xff]
      %v1967 = vld [vmem:[#allocation2 + $0x28] sm:$0xff]
      %v1968 = vld [vmem:[#allocation2 + $0x30] sm:$0xff]
      %v1969 = vld [vmem:[#allocation2 + $0x38] sm:$0xff]
      %v1970 = vld [vmem:[#allocation2 + $0x40] sm:$0xff]
      %v1971 = vld [vmem:[#allocation2 + $0x48] sm:$0xff]
      %v1972 = vld [vmem:[#allocation2 + $0x50] sm:$0xff]
      %v1973 = vld [vmem:[#allocation2 + $0x58] sm:$0xff]
      %v1974 = vld [vmem:[#allocation2 + $0x60] sm:$0xff]
      %v1975 = vld [vmem:[#allocation2 + $0x68] sm:$0xff]
      %v1976 = vld [vmem:[#allocation2 + $0x70] sm:$0xff]
      %v1977 = vld [vmem:[#allocation2 + $0x78] sm:$0xff]
      %v1978 = vld [vmem:[#allocation2 + $0x80] sm:$0xff]
      %v1979 = vld [vmem:[#allocation2 + $0x88] sm:$0xff]
      %v1980 = vadd.f32 %v1962, %v1892
      %v1981 = vadd.f32 %v1963, %v1895
      %v1982 = vadd.f32 %v1964, %v1900
      %v1983 = vadd.f32 %v1965, %v1903
      %v1984 = vadd.f32 %v1966, %v1908
      %v1985 = vadd.f32 %v1967, %v1911
      %v1986 = vadd.f32 %v1968, %v1916
      %v1987 = vadd.f32 %v1969, %v1919
      %v1988 = vadd.f32 %v1970, %v1924
      %v1989 = vadd.f32 %v1971, %v1927
      %v1990 = vadd.f32 %v1972, %v1932
      %v1991 = vadd.f32 %v1973, %v1935
      %v1992 = vadd.f32 %v1974, %v1940
      %v1993 = vadd.f32 %v1975, %v1943
      %v1994 = vadd.f32 %v1976, %v1948
      %v1995 = vadd.f32 %v1977, %v1951
      %v1996 = vadd.f32 %v1978, %v1956
      %v1997 = vadd.f32 %v1979, %v1959
      %1998 = vst [vmem:[#allocation2] sm:$0xff] %v1980
      %1999 = vst [vmem:[#allocation2 + $0x8] sm:$0xff] %v1981
      %2000 = vst [vmem:[#allocation2 + $0x10] sm:$0xff] %v1982
      %2001 = vst [vmem:[#allocation2 + $0x18] sm:$0xff] %v1983
      %2002 = vst [vmem:[#allocation2 + $0x20] sm:$0xff] %v1984
      %2003 = vst [vmem:[#allocation2 + $0x28] sm:$0xff] %v1985
      %2004 = vst [vmem:[#allocation2 + $0x30] sm:$0xff] %v1986
      %2005 = vst [vmem:[#allocation2 + $0x38] sm:$0xff] %v1987
      %2006 = vst [vmem:[#allocation2 + $0x40] sm:$0xff] %v1988
      %2007 = vst [vmem:[#allocation2 + $0x48] sm:$0xff] %v1989
      %2008 = vst [vmem:[#allocation2 + $0x50] sm:$0xff] %v1990
      %2009 = vst [vmem:[#allocation2 + $0x58] sm:$0xff] %v1991
      %2010 = vst [vmem:[#allocation2 + $0x60] sm:$0xff] %v1992
      %2011 = vst [vmem:[#allocation2 + $0x68] sm:$0xff] %v1993
      %2012 = vst [vmem:[#allocation2 + $0x70] sm:$0xff] %v1994
      %2013 = vst [vmem:[#allocation2 + $0x78] sm:$0xff] %v1995
      %2014 = vst [vmem:[#allocation2 + $0x80] sm:$0xff] %v1996
      %2015 = vst [vmem:[#allocation2 + $0x88] sm:$0xff] %v1997
      %v2016 = vld [vmem:[%s1766] sm:$0xff]
      %v2017 = vld [vmem:[%s1766 + $0x8] sm:$0xff]
      %v2018 = vld [vmem:[%s1766 + $0x10] sm:$0xff]
      %v2019 = vld [vmem:[%s1766 + $0x18] sm:$0xff]
      %v2020 = vld [vmem:[%s1766 + $0x20] sm:$0xff]
      %v2021 = vld [vmem:[%s1766 + $0x28] sm:$0xff]
      %v2022 = vld [vmem:[%s1766 + $0x30] sm:$0xff]
      %v2023 = vld [vmem:[%s1766 + $0x38] sm:$0xff]
      %v2024 = vld [vmem:[%s1766 + $0x40] sm:$0xff]
      %v2025 = vld [vmem:[%s1766 + $0x48] sm:$0xff]
      %v2026 = vld [vmem:[%s1766 + $0x50] sm:$0xff]
      %v2027 = vld [vmem:[%s1766 + $0x58] sm:$0xff]
      %v2028 = vld [vmem:[%s1766 + $0x60] sm:$0xff]
      %v2029 = vld [vmem:[%s1766 + $0x68] sm:$0xff]
      %v2030 = vld [vmem:[%s1766 + $0x70] sm:$0xff]
      %v2031 = vld [vmem:[%s1766 + $0x78] sm:$0xff]
      %v2032 = vld [vmem:[%s1766 + $0x80] sm:$0xff]
      %v2033 = vld [vmem:[%s1766 + $0x88] sm:$0xff]
      %v2034 = vld [vmem:[%s1766 + $0x90] sm:$0xff]
      %v2035 = vpack.c.bf16 %v2017, %v2016
      %v2036 = vpack.c.bf16 %v2019, %v2018
      %v2037 = vpack.c.bf16 %v2021, %v2020
      %v2038 = vpack.c.bf16 %v2023, %v2022
      %v2039 = vpack.c.bf16 %v2025, %v2024
      %v2040 = vpack.c.bf16 %v2027, %v2026
      %v2041 = vpack.c.bf16 %v2029, %v2028
      %v2042 = vpack.c.bf16 %v2031, %v2030
      %v2043 = vpack.c.bf16 %v2033, %v2032
      %v2044 = vpack.c.bf16 %v2034, %v2034
      %s2045 = scalar_lea.vmem %s1, 14
      %v2046 = vld [vmem:[%s2045] sm:$0x3]
      %vm2047 = vsmask.f32 5376
      %v2049 = vshrl.u32 %v2035, 16
      %v2051 = vrot.slane %v2049, 2
      %v2052 = vshll.u32 %v2035, 16
      %v2054 = vrot.slane %v2052, 3
      %v2055 = vor.u32 %v2051, %v2054
      %v2057 = vshrl.u32 %v2036, 16
      %v2059 = vrot.slane %v2057, 2
      %v2060 = vshll.u32 %v2036, 16
      %v2062 = vrot.slane %v2060, 3
      %v2063 = vor.u32 %v2059, %v2062
      %v2064 = vsel %vm2047, %v2055, %v2063
      %v2066 = vshrl.u32 %v2037, 16
      %v2068 = vrot.slane %v2066, 2
      %v2069 = vshll.u32 %v2037, 16
      %v2071 = vrot.slane %v2069, 3
      %v2072 = vor.u32 %v2068, %v2071
      %v2073 = vsel %vm2047, %v2063, %v2072
      %v2075 = vshrl.u32 %v2038, 16
      %v2077 = vrot.slane %v2075, 2
      %v2078 = vshll.u32 %v2038, 16
      %v2080 = vrot.slane %v2078, 3
      %v2081 = vor.u32 %v2077, %v2080
      %v2082 = vsel %vm2047, %v2072, %v2081
      %v2084 = vshrl.u32 %v2039, 16
      %v2086 = vrot.slane %v2084, 2
      %v2087 = vshll.u32 %v2039, 16
      %v2089 = vrot.slane %v2087, 3
      %v2090 = vor.u32 %v2086, %v2089
      %v2091 = vsel %vm2047, %v2081, %v2090
      %v2093 = vshrl.u32 %v2040, 16
      %v2095 = vrot.slane %v2093, 2
      %v2096 = vshll.u32 %v2040, 16
      %v2098 = vrot.slane %v2096, 3
      %v2099 = vor.u32 %v2095, %v2098
      %v2100 = vsel %vm2047, %v2090, %v2099
      %v2102 = vshrl.u32 %v2041, 16
      %v2104 = vrot.slane %v2102, 2
      %v2105 = vshll.u32 %v2041, 16
      %v2107 = vrot.slane %v2105, 3
      %v2108 = vor.u32 %v2104, %v2107
      %v2109 = vsel %vm2047, %v2099, %v2108
      %v2111 = vshrl.u32 %v2042, 16
      %v2113 = vrot.slane %v2111, 2
      %v2114 = vshll.u32 %v2042, 16
      %v2116 = vrot.slane %v2114, 3
      %v2117 = vor.u32 %v2113, %v2116
      %v2118 = vsel %vm2047, %v2108, %v2117
      %v2120 = vshrl.u32 %v2043, 16
      %v2122 = vrot.slane %v2120, 2
      %v2123 = vshll.u32 %v2043, 16
      %v2125 = vrot.slane %v2123, 3
      %v2126 = vor.u32 %v2122, %v2125
      %v2127 = vsel %vm2047, %v2117, %v2126
      %v2129 = vshrl.u32 %v2044, 16
      %v2131 = vrot.slane %v2129, 2
      %v2132 = vshll.u32 %v2044, 16
      %v2134 = vrot.slane %v2132, 3
      %v2135 = vor.u32 %v2131, %v2134
      %v2136 = vsel %vm2047, %v2126, %v2135
      %v2138 = vsel %vm252, %v2064, 0
      %v2141 = vsel %vm252, %v2073, 0
      %v2144 = vsel %vm252, %v2082, 0
      %v2147 = vsel %vm252, %v2091, 0
      %v2150 = vsel %vm252, %v2100, 0
      %v2153 = vsel %vm252, %v2109, 0
      %v2156 = vsel %vm252, %v2118, 0
      %v2159 = vsel %vm252, %v2127, 0
      %v2162 = vsel %vm252, %v2136, 0
      %v2165 = vsel %vm280, %v2046, 0
      %2167 = vmatprep.subr.bf16.mxu0 0
      %2168 = vmatpush1.bf16.msra.mxu0 %v2165
      %2169 = vmatprep.subr.bf16.mxu0 0
      %2170 = vmatpush1.bf16.msra.mxu0 0
      %2171 = vmatprep.subr.bf16.mxu0 0
      %2172 = vmatpush1.bf16.msra.mxu0 0
      %2173 = vmatprep.subr.bf16.mxu0 0
      %2174 = vmatpush1.bf16.msra.mxu0 0
      %2175 = vmatprep.subr.bf16.mxu0 0
      %2176 = vmatpush1.bf16.msra.mxu0 0
      %2177 = vmatprep.subr.bf16.mxu0 0
      %2178 = vmatpush1.bf16.msra.mxu0 0
      %2179 = vmatprep.subr.bf16.mxu0 0
      %2180 = vmatpush1.bf16.msra.mxu0 0
      %2181 = vmatprep.subr.bf16.mxu0 0
      %2182 = vmatpush1.bf16.msra.mxu0 0
      %2183 = vmatprep.subr.bf16.mxu0 0
      %2184 = vmatpush1.bf16.msra.mxu0 0
      %2185 = vmatprep.subr.bf16.mxu0 0
      %2186 = vmatpush1.bf16.msra.mxu0 0
      %2187 = vmatprep.subr.bf16.mxu0 0
      %2188 = vmatpush1.bf16.msra.mxu0 0
      %2189 = vmatprep.subr.bf16.mxu0 0
      %2190 = vmatpush1.bf16.msra.mxu0 0
      %2191 = vmatprep.subr.bf16.mxu0 0
      %2192 = vmatpush1.bf16.msra.mxu0 0
      %2193 = vmatprep.subr.bf16.mxu0 0
      %2194 = vmatpush1.bf16.msra.mxu0 0
      %2195 = vmatprep.subr.bf16.mxu0 0
      %2196 = vmatpush1.bf16.msra.mxu0 0
      %2197 = vmatprep.subr.bf16.mxu0 0
      %2198 = vmatpush1.bf16.msra.mxu0 0
      %2199 = vmatprep.mubr.bf16.mxu0 0
      %2200 = vmatmul.mubr.bf16.gmra.mrb[0].mxu0 %v2138
      %v2201 = vpop.f32.mrb[0].mxu0
      %v2202 = vadd.f32 0.0, %v2201
      %v2203 = vpop.f32.mrb[0].mxu0
      %v2204 = vpop.f32.mrb[0].mxu0
      %v2205 = vadd.f32 0.0, %v2204
      %v2206 = vpop.f32.mrb[0].mxu0
      %2207 = vmatprep.mubr.bf16.mxu0 0
      %2208 = vmatmul.mubr.bf16.gmra.mrb[0].mxu0 %v2141
      %v2209 = vpop.f32.mrb[0].mxu0
      %v2210 = vadd.f32 0.0, %v2209
      %v2211 = vpop.f32.mrb[0].mxu0
      %v2212 = vpop.f32.mrb[0].mxu0
      %v2213 = vadd.f32 0.0, %v2212
      %v2214 = vpop.f32.mrb[0].mxu0
      %2215 = vmatprep.mubr.bf16.mxu0 0
      %2216 = vmatmul.mubr.bf16.gmra.mrb[0].mxu0 %v2144
      %v2217 = vpop.f32.mrb[0].mxu0
      %v2218 = vadd.f32 0.0, %v2217
      %v2219 = vpop.f32.mrb[0].mxu0
      %v2220 = vpop.f32.mrb[0].mxu0
      %v2221 = vadd.f32 0.0, %v2220
      %v2222 = vpop.f32.mrb[0].mxu0
      %2223 = vmatprep.mubr.bf16.mxu0 0
      %2224 = vmatmul.mubr.bf16.gmra.mrb[0].mxu0 %v2147
      %v2225 = vpop.f32.mrb[0].mxu0
      %v2226 = vadd.f32 0.0, %v2225
      %v2227 = vpop.f32.mrb[0].mxu0
      %v2228 = vpop.f32.mrb[0].mxu0
      %v2229 = vadd.f32 0.0, %v2228
      %v2230 = vpop.f32.mrb[0].mxu0
      %2231 = vmatprep.mubr.bf16.mxu0 0
      %2232 = vmatmul.mubr.bf16.gmra.mrb[0].mxu0 %v2150
      %v2233 = vpop.f32.mrb[0].mxu0
      %v2234 = vadd.f32 0.0, %v2233
      %v2235 = vpop.f32.mrb[0].mxu0
      %v2236 = vpop.f32.mrb[0].mxu0
      %v2237 = vadd.f32 0.0, %v2236
      %v2238 = vpop.f32.mrb[0].mxu0
      %2239 = vmatprep.mubr.bf16.mxu0 0
      %2240 = vmatmul.mubr.bf16.gmra.mrb[0].mxu0 %v2153
      %v2241 = vpop.f32.mrb[0].mxu0
      %v2242 = vadd.f32 0.0, %v2241
      %v2243 = vpop.f32.mrb[0].mxu0
      %v2244 = vpop.f32.mrb[0].mxu0
      %v2245 = vadd.f32 0.0, %v2244
      %v2246 = vpop.f32.mrb[0].mxu0
      %2247 = vmatprep.mubr.bf16.mxu0 0
      %2248 = vmatmul.mubr.bf16.gmra.mrb[0].mxu0 %v2156
      %v2249 = vpop.f32.mrb[0].mxu0
      %v2250 = vadd.f32 0.0, %v2249
      %v2251 = vpop.f32.mrb[0].mxu0
      %v2252 = vpop.f32.mrb[0].mxu0
      %v2253 = vadd.f32 0.0, %v2252
      %v2254 = vpop.f32.mrb[0].mxu0
      %2255 = vmatprep.mubr.bf16.mxu0 0
      %2256 = vmatmul.mubr.bf16.gmra.mrb[0].mxu0 %v2159
      %v2257 = vpop.f32.mrb[0].mxu0
      %v2258 = vadd.f32 0.0, %v2257
      %v2259 = vpop.f32.mrb[0].mxu0
      %v2260 = vpop.f32.mrb[0].mxu0
      %v2261 = vadd.f32 0.0, %v2260
      %v2262 = vpop.f32.mrb[0].mxu0
      %2263 = vmatprep.mubr.bf16.mxu0 0
      %2264 = vmatmul.mubr.bf16.gmra.mrb[0].mxu0 %v2162
      %v2265 = vpop.f32.mrb[0].mxu0
      %v2266 = vadd.f32 0.0, %v2265
      %v2267 = vpop.f32.mrb[0].mxu0
      %v2268 = vpop.f32.mrb[0].mxu0
      %v2269 = vadd.f32 0.0, %v2268
      %v2270 = vpop.f32.mrb[0].mxu0
      %2271 = vdwg.mxu0
      %v2272 = vld [vmem:[#allocation2] sm:$0xff]
      %v2273 = vld [vmem:[#allocation2 + $0x8] sm:$0xff]
      %v2274 = vld [vmem:[#allocation2 + $0x10] sm:$0xff]
      %v2275 = vld [vmem:[#allocation2 + $0x18] sm:$0xff]
      %v2276 = vld [vmem:[#allocation2 + $0x20] sm:$0xff]
      %v2277 = vld [vmem:[#allocation2 + $0x28] sm:$0xff]
      %v2278 = vld [vmem:[#allocation2 + $0x30] sm:$0xff]
      %v2279 = vld [vmem:[#allocation2 + $0x38] sm:$0xff]
      %v2280 = vld [vmem:[#allocation2 + $0x40] sm:$0xff]
      %v2281 = vld [vmem:[#allocation2 + $0x48] sm:$0xff]
      %v2282 = vld [vmem:[#allocation2 + $0x50] sm:$0xff]
      %v2283 = vld [vmem:[#allocation2 + $0x58] sm:$0xff]
      %v2284 = vld [vmem:[#allocation2 + $0x60] sm:$0xff]
      %v2285 = vld [vmem:[#allocation2 + $0x68] sm:$0xff]
      %v2286 = vld [vmem:[#allocation2 + $0x70] sm:$0xff]
      %v2287 = vld [vmem:[#allocation2 + $0x78] sm:$0xff]
      %v2288 = vld [vmem:[#allocation2 + $0x80] sm:$0xff]
      %v2289 = vld [vmem:[#allocation2 + $0x88] sm:$0xff]
      %v2290 = vadd.f32 %v2272, %v2202
      %v2291 = vadd.f32 %v2273, %v2205
      %v2292 = vadd.f32 %v2274, %v2210
      %v2293 = vadd.f32 %v2275, %v2213
      %v2294 = vadd.f32 %v2276, %v2218
      %v2295 = vadd.f32 %v2277, %v2221
      %v2296 = vadd.f32 %v2278, %v2226
      %v2297 = vadd.f32 %v2279, %v2229
      %v2298 = vadd.f32 %v2280, %v2234
      %v2299 = vadd.f32 %v2281, %v2237
      %v2300 = vadd.f32 %v2282, %v2242
      %v2301 = vadd.f32 %v2283, %v2245
      %v2302 = vadd.f32 %v2284, %v2250
      %v2303 = vadd.f32 %v2285, %v2253
      %v2304 = vadd.f32 %v2286, %v2258
      %v2305 = vadd.f32 %v2287, %v2261
      %v2306 = vadd.f32 %v2288, %v2266
      %v2307 = vadd.f32 %v2289, %v2269
      %2308 = vst [vmem:[#allocation2] sm:$0xff] %v2290
      %2309 = vst [vmem:[#allocation2 + $0x8] sm:$0xff] %v2291
      %2310 = vst [vmem:[#allocation2 + $0x10] sm:$0xff] %v2292
      %2311 = vst [vmem:[#allocation2 + $0x18] sm:$0xff] %v2293
      %2312 = vst [vmem:[#allocation2 + $0x20] sm:$0xff] %v2294
      %2313 = vst [vmem:[#allocation2 + $0x28] sm:$0xff] %v2295
      %2314 = vst [vmem:[#allocation2 + $0x30] sm:$0xff] %v2296
      %2315 = vst [vmem:[#allocation2 + $0x38] sm:$0xff] %v2297
      %2316 = vst [vmem:[#allocation2 + $0x40] sm:$0xff] %v2298
      %2317 = vst [vmem:[#allocation2 + $0x48] sm:$0xff] %v2299
      %2318 = vst [vmem:[#allocation2 + $0x50] sm:$0xff] %v2300
      %2319 = vst [vmem:[#allocation2 + $0x58] sm:$0xff] %v2301
      %2320 = vst [vmem:[#allocation2 + $0x60] sm:$0xff] %v2302
      %2321 = vst [vmem:[#allocation2 + $0x68] sm:$0xff] %v2303
      %2322 = vst [vmem:[#allocation2 + $0x70] sm:$0xff] %v2304
      %2323 = vst [vmem:[#allocation2 + $0x78] sm:$0xff] %v2305
      %2324 = vst [vmem:[#allocation2 + $0x80] sm:$0xff] %v2306
      %2325 = vst [vmem:[#allocation2 + $0x88] sm:$0xff] %v2307
      %v2326 = vld [vmem:[%s1766] sm:$0xff]
      %v2327 = vld [vmem:[%s1766 + $0x8] sm:$0xff]
      %v2328 = vld [vmem:[%s1766 + $0x10] sm:$0xff]
      %v2329 = vld [vmem:[%s1766 + $0x18] sm:$0xff]
      %v2330 = vld [vmem:[%s1766 + $0x20] sm:$0xff]
      %v2331 = vld [vmem:[%s1766 + $0x28] sm:$0xff]
      %v2332 = vld [vmem:[%s1766 + $0x30] sm:$0xff]
      %v2333 = vld [vmem:[%s1766 + $0x38] sm:$0xff]
      %v2334 = vld [vmem:[%s1766 + $0x40] sm:$0xff]
      %v2335 = vld [vmem:[%s1766 + $0x48] sm:$0xff]
      %v2336 = vld [vmem:[%s1766 + $0x50] sm:$0xff]
      %v2337 = vld [vmem:[%s1766 + $0x58] sm:$0xff]
      %v2338 = vld [vmem:[%s1766 + $0x60] sm:$0xff]
      %v2339 = vld [vmem:[%s1766 + $0x68] sm:$0xff]
      %v2340 = vld [vmem:[%s1766 + $0x70] sm:$0xff]
      %v2341 = vld [vmem:[%s1766 + $0x78] sm:$0xff]
      %v2342 = vld [vmem:[%s1766 + $0x80] sm:$0xff]
      %v2343 = vld [vmem:[%s1766 + $0x88] sm:$0xff]
      %v2344 = vld [vmem:[%s1766 + $0x90] sm:$0xff]
      %v2345 = vpack.c.bf16 %v2327, %v2326
      %v2346 = vpack.c.bf16 %v2329, %v2328
      %v2347 = vpack.c.bf16 %v2331, %v2330
      %v2348 = vpack.c.bf16 %v2333, %v2332
      %v2349 = vpack.c.bf16 %v2335, %v2334
      %v2350 = vpack.c.bf16 %v2337, %v2336
      %v2351 = vpack.c.bf16 %v2339, %v2338
      %v2352 = vpack.c.bf16 %v2341, %v2340
      %v2353 = vpack.c.bf16 %v2343, %v2342
      %v2354 = vpack.c.bf16 %v2344, %v2344
      %s2355 = scalar_lea.vmem %s1, 16
      %v2356 = vld [vmem:[%s2355] sm:$0x3]
      %vm2367 = vcmask 1044480
      %v2368 = vrot.slane %v2345, 3
      %v2369 = vrot.slane %v2346, 3
      %v2370 = vsel %vm2367, %v2368, %v2369
      %v2371 = vrot.slane %v2347, 3
      %v2372 = vsel %vm2367, %v2369, %v2371
      %v2373 = vrot.slane %v2348, 3
      %v2374 = vsel %vm2367, %v2371, %v2373
      %v2375 = vrot.slane %v2349, 3
      %v2376 = vsel %vm2367, %v2373, %v2375
      %v2377 = vrot.slane %v2350, 3
      %v2378 = vsel %vm2367, %v2375, %v2377
      %v2379 = vrot.slane %v2351, 3
      %v2380 = vsel %vm2367, %v2377, %v2379
      %v2381 = vrot.slane %v2352, 3
      %v2382 = vsel %vm2367, %v2379, %v2381
      %v2383 = vrot.slane %v2353, 3
      %v2384 = vsel %vm2367, %v2381, %v2383
      %v2385 = vrot.slane %v2354, 3
      %v2386 = vsel %vm2367, %v2383, %v2385
      %v2388 = vsel %vm252, %v2370, 0
      %v2391 = vsel %vm252, %v2372, 0
      %v2394 = vsel %vm252, %v2374, 0
      %v2397 = vsel %vm252, %v2376, 0
      %v2400 = vsel %vm252, %v2378, 0
      %v2403 = vsel %vm252, %v2380, 0
      %v2406 = vsel %vm252, %v2382, 0
      %v2409 = vsel %vm252, %v2384, 0
      %v2412 = vsel %vm252, %v2386, 0
      %v2415 = vsel %vm280, %v2356, 0
      %2417 = vmatprep.subr.bf16.mxu0 0
      %2418 = vmatpush1.bf16.msra.mxu0 %v2415
      %2419 = vmatprep.subr.bf16.mxu0 0
      %2420 = vmatpush1.bf16.msra.mxu0 0
      %2421 = vmatprep.subr.bf16.mxu0 0
      %2422 = vmatpush1.bf16.msra.mxu0 0
      %2423 = vmatprep.subr.bf16.mxu0 0
      %2424 = vmatpush1.bf16.msra.mxu0 0
      %2425 = vmatprep.subr.bf16.mxu0 0
      %2426 = vmatpush1.bf16.msra.mxu0 0
      %2427 = vmatprep.subr.bf16.mxu0 0
      %2428 = vmatpush1.bf16.msra.mxu0 0
      %2429 = vmatprep.subr.bf16.mxu0 0
      %2430 = vmatpush1.bf16.msra.mxu0 0
      %2431 = vmatprep.subr.bf16.mxu0 0
      %2432 = vmatpush1.bf16.msra.mxu0 0
      %2433 = vmatprep.subr.bf16.mxu0 0
      %2434 = vmatpush1.bf16.msra.mxu0 0
      %2435 = vmatprep.subr.bf16.mxu0 0
      %2436 = vmatpush1.bf16.msra.mxu0 0
      %2437 = vmatprep.subr.bf16.mxu0 0
      %2438 = vmatpush1.bf16.msra.mxu0 0
      %2439 = vmatprep.subr.bf16.mxu0 0
      %2440 = vmatpush1.bf16.msra.mxu0 0
      %2441 = vmatprep.subr.bf16.mxu0 0
      %2442 = vmatpush1.bf16.msra.mxu0 0
      %2443 = vmatprep.subr.bf16.mxu0 0
      %2444 = vmatpush1.bf16.msra.mxu0 0
      %2445 = vmatprep.subr.bf16.mxu0 0
      %2446 = vmatpush1.bf16.msra.mxu0 0
      %2447 = vmatprep.subr.bf16.mxu0 0
      %2448 = vmatpush1.bf16.msra.mxu0 0
      %2449 = vmatprep.mubr.bf16.mxu0 0
      %2450 = vmatmul.mubr.bf16.gmra.mrb[0].mxu0 %v2388
      %v2451 = vpop.f32.mrb[0].mxu0
      %v2452 = vadd.f32 0.0, %v2451
      %v2453 = vpop.f32.mrb[0].mxu0
      %v2454 = vpop.f32.mrb[0].mxu0
      %v2455 = vadd.f32 0.0, %v2454
      %v2456 = vpop.f32.mrb[0].mxu0
      %2457 = vmatprep.mubr.bf16.mxu0 0
      %2458 = vmatmul.mubr.bf16.gmra.mrb[0].mxu0 %v2391
      %v2459 = vpop.f32.mrb[0].mxu0
      %v2460 = vadd.f32 0.0, %v2459
      %v2461 = vpop.f32.mrb[0].mxu0
      %v2462 = vpop.f32.mrb[0].mxu0
      %v2463 = vadd.f32 0.0, %v2462
      %v2464 = vpop.f32.mrb[0].mxu0
      %2465 = vmatprep.mubr.bf16.mxu0 0
      %2466 = vmatmul.mubr.bf16.gmra.mrb[0].mxu0 %v2394
      %v2467 = vpop.f32.mrb[0].mxu0
      %v2468 = vadd.f32 0.0, %v2467
      %v2469 = vpop.f32.mrb[0].mxu0
      %v2470 = vpop.f32.mrb[0].mxu0
      %v2471 = vadd.f32 0.0, %v2470
      %v2472 = vpop.f32.mrb[0].mxu0
      %2473 = vmatprep.mubr.bf16.mxu0 0
      %2474 = vmatmul.mubr.bf16.gmra.mrb[0].mxu0 %v2397
      %v2475 = vpop.f32.mrb[0].mxu0
      %v2476 = vadd.f32 0.0, %v2475
      %v2477 = vpop.f32.mrb[0].mxu0
      %v2478 = vpop.f32.mrb[0].mxu0
      %v2479 = vadd.f32 0.0, %v2478
      %v2480 = vpop.f32.mrb[0].mxu0
      %2481 = vmatprep.mubr.bf16.mxu0 0
      %2482 = vmatmul.mubr.bf16.gmra.mrb[0].mxu0 %v2400
      %v2483 = vpop.f32.mrb[0].mxu0
      %v2484 = vadd.f32 0.0, %v2483
      %v2485 = vpop.f32.mrb[0].mxu0
      %v2486 = vpop.f32.mrb[0].mxu0
      %v2487 = vadd.f32 0.0, %v2486
      %v2488 = vpop.f32.mrb[0].mxu0
      %2489 = vmatprep.mubr.bf16.mxu0 0
      %2490 = vmatmul.mubr.bf16.gmra.mrb[0].mxu0 %v2403
      %v2491 = vpop.f32.mrb[0].mxu0
      %v2492 = vadd.f32 0.0, %v2491
      %v2493 = vpop.f32.mrb[0].mxu0
      %v2494 = vpop.f32.mrb[0].mxu0
      %v2495 = vadd.f32 0.0, %v2494
      %v2496 = vpop.f32.mrb[0].mxu0
      %2497 = vmatprep.mubr.bf16.mxu0 0
      %2498 = vmatmul.mubr.bf16.gmra.mrb[0].mxu0 %v2406
      %v2499 = vpop.f32.mrb[0].mxu0
      %v2500 = vadd.f32 0.0, %v2499
      %v2501 = vpop.f32.mrb[0].mxu0
      %v2502 = vpop.f32.mrb[0].mxu0
      %v2503 = vadd.f32 0.0, %v2502
      %v2504 = vpop.f32.mrb[0].mxu0
      %2505 = vmatprep.mubr.bf16.mxu0 0
      %2506 = vmatmul.mubr.bf16.gmra.mrb[0].mxu0 %v2409
      %v2507 = vpop.f32.mrb[0].mxu0
      %v2508 = vadd.f32 0.0, %v2507
      %v2509 = vpop.f32.mrb[0].mxu0
      %v2510 = vpop.f32.mrb[0].mxu0
      %v2511 = vadd.f32 0.0, %v2510
      %v2512 = vpop.f32.mrb[0].mxu0
      %2513 = vmatprep.mubr.bf16.mxu0 0
      %2514 = vmatmul.mubr.bf16.gmra.mrb[0].mxu0 %v2412
      %v2515 = vpop.f32.mrb[0].mxu0
      %v2516 = vadd.f32 0.0, %v2515
      %v2517 = vpop.f32.mrb[0].mxu0
      %v2518 = vpop.f32.mrb[0].mxu0
      %v2519 = vadd.f32 0.0, %v2518
      %v2520 = vpop.f32.mrb[0].mxu0
      %2521 = vdwg.mxu0
      %v2522 = vld [vmem:[#allocation2] sm:$0xff]
      %v2523 = vld [vmem:[#allocation2 + $0x8] sm:$0xff]
      %v2524 = vld [vmem:[#allocation2 + $0x10] sm:$0xff]
      %v2525 = vld [vmem:[#allocation2 + $0x18] sm:$0xff]
      %v2526 = vld [vmem:[#allocation2 + $0x20] sm:$0xff]
      %v2527 = vld [vmem:[#allocation2 + $0x28] sm:$0xff]
      %v2528 = vld [vmem:[#allocation2 + $0x30] sm:$0xff]
      %v2529 = vld [vmem:[#allocation2 + $0x38] sm:$0xff]
      %v2530 = vld [vmem:[#allocation2 + $0x40] sm:$0xff]
      %v2531 = vld [vmem:[#allocation2 + $0x48] sm:$0xff]
      %v2532 = vld [vmem:[#allocation2 + $0x50] sm:$0xff]
      %v2533 = vld [vmem:[#allocation2 + $0x58] sm:$0xff]
      %v2534 = vld [vmem:[#allocation2 + $0x60] sm:$0xff]
      %v2535 = vld [vmem:[#allocation2 + $0x68] sm:$0xff]
      %v2536 = vld [vmem:[#allocation2 + $0x70] sm:$0xff]
      %v2537 = vld [vmem:[#allocation2 + $0x78] sm:$0xff]
      %v2538 = vld [vmem:[#allocation2 + $0x80] sm:$0xff]
      %v2539 = vld [vmem:[#allocation2 + $0x88] sm:$0xff]
      %v2540 = vadd.f32 %v2522, %v2452
      %v2541 = vadd.f32 %v2523, %v2455
      %v2542 = vadd.f32 %v2524, %v2460
      %v2543 = vadd.f32 %v2525, %v2463
      %v2544 = vadd.f32 %v2526, %v2468
      %v2545 = vadd.f32 %v2527, %v2471
      %v2546 = vadd.f32 %v2528, %v2476
      %v2547 = vadd.f32 %v2529, %v2479
      %v2548 = vadd.f32 %v2530, %v2484
      %v2549 = vadd.f32 %v2531, %v2487
      %v2550 = vadd.f32 %v2532, %v2492
      %v2551 = vadd.f32 %v2533, %v2495
      %v2552 = vadd.f32 %v2534, %v2500
      %v2553 = vadd.f32 %v2535, %v2503
      %v2554 = vadd.f32 %v2536, %v2508
      %v2555 = vadd.f32 %v2537, %v2511
      %v2556 = vadd.f32 %v2538, %v2516
      %v2557 = vadd.f32 %v2539, %v2519
      %2558 = vst [vmem:[#allocation2] sm:$0xff] %v2540
      %2559 = vst [vmem:[#allocation2 + $0x8] sm:$0xff] %v2541
      %2560 = vst [vmem:[#allocation2 + $0x10] sm:$0xff] %v2542
      %2561 = vst [vmem:[#allocation2 + $0x18] sm:$0xff] %v2543
      %2562 = vst [vmem:[#allocation2 + $0x20] sm:$0xff] %v2544
      %2563 = vst [vmem:[#allocation2 + $0x28] sm:$0xff] %v2545
      %2564 = vst [vmem:[#allocation2 + $0x30] sm:$0xff] %v2546
      %2565 = vst [vmem:[#allocation2 + $0x38] sm:$0xff] %v2547
      %2566 = vst [vmem:[#allocation2 + $0x40] sm:$0xff] %v2548
      %2567 = vst [vmem:[#allocation2 + $0x48] sm:$0xff] %v2549
      %2568 = vst [vmem:[#allocation2 + $0x50] sm:$0xff] %v2550
      %2569 = vst [vmem:[#allocation2 + $0x58] sm:$0xff] %v2551
      %2570 = vst [vmem:[#allocation2 + $0x60] sm:$0xff] %v2552
      %2571 = vst [vmem:[#allocation2 + $0x68] sm:$0xff] %v2553
      %2572 = vst [vmem:[#allocation2 + $0x70] sm:$0xff] %v2554
      %2573 = vst [vmem:[#allocation2 + $0x78] sm:$0xff] %v2555
      %2574 = vst [vmem:[#allocation2 + $0x80] sm:$0xff] %v2556
      %2575 = vst [vmem:[#allocation2 + $0x88] sm:$0xff] %v2557
      %v2576 = vld [vmem:[#allocation2] sm:$0xff]
      %v2577 = vld [vmem:[#allocation2 + $0x8] sm:$0xff]
      %v2578 = vld [vmem:[#allocation2 + $0x10] sm:$0xff]
      %v2579 = vld [vmem:[#allocation2 + $0x18] sm:$0xff]
      %v2580 = vld [vmem:[#allocation2 + $0x20] sm:$0xff]
      %v2581 = vld [vmem:[#allocation2 + $0x28] sm:$0xff]
      %v2582 = vld [vmem:[#allocation2 + $0x30] sm:$0xff]
      %v2583 = vld [vmem:[#allocation2 + $0x38] sm:$0xff]
      %v2584 = vld [vmem:[#allocation2 + $0x40] sm:$0xff]
      %v2585 = vld [vmem:[#allocation2 + $0x48] sm:$0xff]
      %v2586 = vld [vmem:[#allocation2 + $0x50] sm:$0xff]
      %v2587 = vld [vmem:[#allocation2 + $0x58] sm:$0xff]
      %v2588 = vld [vmem:[#allocation2 + $0x60] sm:$0xff]
      %v2589 = vld [vmem:[#allocation2 + $0x68] sm:$0xff]
      %v2590 = vld [vmem:[#allocation2 + $0x70] sm:$0xff]
      %v2591 = vld [vmem:[#allocation2 + $0x78] sm:$0xff]
      %v2592 = vld [vmem:[#allocation2 + $0x80] sm:$0xff]
      %v2593 = vld [vmem:[#allocation2 + $0x88] sm:$0xff]
      %v2594 = vld [vmem:[%s2] sm:$0x1]
      %v2596 = vlaneseq
      %v2597 = vshrl.u32 %v2596, 7
      %v2598 = vsub.s32 0, %v2597
      %v2599 = vrot.slane %v2594, %v2598
      %v2601 = vmul.f32 %v2576, %v2599
      %v2602 = vmul.f32 %v2577, %v2599
      %v2603 = vmul.f32 %v2578, %v2599
      %v2604 = vmul.f32 %v2579, %v2599
      %v2605 = vmul.f32 %v2580, %v2599
      %v2606 = vmul.f32 %v2581, %v2599
      %v2607 = vmul.f32 %v2582, %v2599
      %v2608 = vmul.f32 %v2583, %v2599
      %v2609 = vmul.f32 %v2584, %v2599
      %v2610 = vmul.f32 %v2585, %v2599
      %v2611 = vmul.f32 %v2586, %v2599
      %v2612 = vmul.f32 %v2587, %v2599
      %v2613 = vmul.f32 %v2588, %v2599
      %v2614 = vmul.f32 %v2589, %v2599
      %v2615 = vmul.f32 %v2590, %v2599
      %v2616 = vmul.f32 %v2591, %v2599
      %v2617 = vmul.f32 %v2592, %v2599
      %v2618 = vmul.f32 %v2593, %v2599
      %v2619 = vld [vmem:[%s3] sm:$0x1]
      %v2621 = vlaneseq
      %v2622 = vshrl.u32 %v2621, 7
      %v2623 = vsub.s32 0, %v2622
      %v2624 = vrot.slane %v2619, %v2623
      %v2626 = vadd.f32 %v2601, %v2624
      %v2627 = vadd.f32 %v2602, %v2624
      %v2628 = vadd.f32 %v2603, %v2624
      %v2629 = vadd.f32 %v2604, %v2624
      %v2630 = vadd.f32 %v2605, %v2624
      %v2631 = vadd.f32 %v2606, %v2624
      %v2632 = vadd.f32 %v2607, %v2624
      %v2633 = vadd.f32 %v2608, %v2624
      %v2634 = vadd.f32 %v2609, %v2624
      %v2635 = vadd.f32 %v2610, %v2624
      %v2636 = vadd.f32 %v2611, %v2624
      %v2637 = vadd.f32 %v2612, %v2624
      %v2638 = vadd.f32 %v2613, %v2624
      %v2639 = vadd.f32 %v2614, %v2624
      %v2640 = vadd.f32 %v2615, %v2624
      %v2641 = vadd.f32 %v2616, %v2624
      %v2642 = vadd.f32 %v2617, %v2624
      %v2643 = vadd.f32 %v2618, %v2624
      %v2644 = vmax.f32 %v2626, 0.0
      %v2645 = vmax.f32 %v2627, 0.0
      %v2646 = vmax.f32 %v2628, 0.0
      %v2647 = vmax.f32 %v2629, 0.0
      %v2648 = vmax.f32 %v2630, 0.0
      %v2649 = vmax.f32 %v2631, 0.0
      %v2650 = vmax.f32 %v2632, 0.0
      %v2651 = vmax.f32 %v2633, 0.0
      %v2652 = vmax.f32 %v2634, 0.0
      %v2653 = vmax.f32 %v2635, 0.0
      %v2654 = vmax.f32 %v2636, 0.0
      %v2655 = vmax.f32 %v2637, 0.0
      %v2656 = vmax.f32 %v2638, 0.0
      %v2657 = vmax.f32 %v2639, 0.0
      %v2658 = vmax.f32 %v2640, 0.0
      %v2659 = vmax.f32 %v2641, 0.0
      %v2660 = vmax.f32 %v2642, 0.0
      %v2661 = vmax.f32 %v2643, 0.0
      %2662 = vst [vmem:[%s219] sm:$0xff] %v2644
      %2663 = vst [vmem:[%s219 + $0x8] sm:$0xff] %v2645
      %2664 = vst [vmem:[%s219 + $0x10] sm:$0xff] %v2646
      %2665 = vst [vmem:[%s219 + $0x18] sm:$0xff] %v2647
      %2666 = vst [vmem:[%s219 + $0x20] sm:$0xff] %v2648
      %2667 = vst [vmem:[%s219 + $0x28] sm:$0xff] %v2649
      %2668 = vst [vmem:[%s219 + $0x30] sm:$0xff] %v2650
      %2669 = vst [vmem:[%s219 + $0x38] sm:$0xff] %v2651
      %2670 = vst [vmem:[%s219 + $0x40] sm:$0xff] %v2652
      %2671 = vst [vmem:[%s219 + $0x48] sm:$0xff] %v2653
      %2672 = vst [vmem:[%s219 + $0x50] sm:$0xff] %v2654
      %2673 = vst [vmem:[%s219 + $0x58] sm:$0xff] %v2655
      %2674 = vst [vmem:[%s219 + $0x60] sm:$0xff] %v2656
      %2675 = vst [vmem:[%s219 + $0x68] sm:$0xff] %v2657
      %2676 = vst [vmem:[%s219 + $0x70] sm:$0xff] %v2658
      %2677 = vst [vmem:[%s219 + $0x78] sm:$0xff] %v2659
      %2678 = vst [vmem:[%s219 + $0x80] sm:$0xff] %v2660
      %2679 = vst [vmem:[%s219 + $0x88] sm:$0xff] %v2661
      %s2680 = smul.u32 18, %s20
      %p2681 = scmp.lt.s32.totalorder %s19, 1
      %s2682 = scalar_select %p2681, %s19, 1
      %p2683 = scmp.lt.s32.totalorder %s2680, 35
      %s2684 = scalar_select %p2683, %s2680, 35
      %s2685 = smul.addr %s2682, 36
      %s2686 = sadd.s32 %s2684, %s2685
      %s2687 = smul.addr %s2686, 8
      %s2688 = scalar_lea.vmem %s4, %s2687
      // Predicated region
      $region37: #{basic_conv2d.1} parent=35 // pred_check
        %p2689 = pneg %p136
      $region38: #{basic_conv2d.1} parent=35 // pred_check_branch
        %2691 = sbr.rel (%p2689) target = $region40
      $region39: #{basic_conv2d.1} parent=35 // pred_region
        %s2692 = smul.u32 18, %s20
      $region40: #{basic_conv2d.1} parent=35 // pred_fallthru
        _
    $region36: #{basic_conv2d.1} parent=5 // pred_fallthru
      _
    %p2693 = scmp.le.s32.totalorder 2, %s10
    // Predicated region
    $region41: #{basic_conv2d.1} parent=5 // pred_check
      %p2694 = pneg %p2693
    $region42: #{basic_conv2d.1} parent=5 // pred_check_branch
      %2696 = sbr.rel (%p2694) target = $region44
    $region43: #{basic_conv2d.1} parent=5 // pred_region
      %s2697 = ssub.s32 %s10, 2
      // Predicated region
      $region45: #{basic_conv2d.1} parent=43 // pred_check
        %p2698 = pneg %p142
      $region46: #{basic_conv2d.1} parent=43 // pred_check_branch
        %2700 = sbr.rel (%p2698) target = $region48
      $region47: #{basic_conv2d.1} parent=43 // pred_region
        %s2701 = smul.u32 18, %s22
        %p2702 = scmp.lt.s32.totalorder %s21, 1
        %s2703 = scalar_select %p2702, %s21, 1
        %p2704 = scmp.lt.s32.totalorder %s2701, 35
        %s2705 = scalar_select %p2704, %s2701, 35
        %s2706 = smul.addr %s2703, 36
        %s2707 = sadd.s32 %s2705, %s2706
        %s2708 = smul.addr %s2707, 8
        %s2709 = scalar_lea.vmem %s4, %s2708
      $region48: #{basic_conv2d.1} parent=43 // pred_fallthru
        _
    $region44: #{basic_conv2d.1} parent=5 // pred_fallthru
      _
  $region6: #{basic_conv2d.1} parent=0 // loop_footer
    %s14 = sadd.s32 1, %s10
  $region7: #{basic_conv2d.1} parent=0 // loop_footer_branch
    %9 = sbr.rel target = $region3
  $region8: #{basic_conv2d.1} parent=0 // loop_exit
    _

</llo_original>
